<compile_context>
chip_gen: v6e
topology: v6e:2x2x1
jax: 0.10.0
libtpu: 0.0.40
codegen_flags: <defaults>
</compile_context>

<pallas_src>
import numpy as np

import jax
import jax.numpy as jnp
from jax.experimental import pallas as pl
from jax.experimental.pallas import tpu as pltpu  # noqa: F401  (TPU backend)

_MATMUL_DTYPE = jnp.bfloat16  # MXU operand dtype; accumulate/epilogue in float32
_LANES = 128                  # padded channel width (lane-dense)
_IN_PAD = 128                 # padded input-feature width


# --------------------------------------------------------------------------- #
# Static shape helpers
# --------------------------------------------------------------------------- #
def _round_up(x, m):
    return ((x + m - 1) // m) * m


def _static_dims(filter_widths, B, T):
    T_list = [T]
    for fw in filter_widths:
        T_list.append((T_list[-1] - fw) // fw + 1)
    assert all(t > 0 for t in T_list), "sequence too short for filter_widths"
    M = [B * t for t in T_list]
    M_pad = [_round_up(m, 8) for m in M]
    return T_list, M, M_pad


def _bn_affine(bn_params, eps=1e-5):
    gamma, beta, mean, var = bn_params
    s = gamma / jnp.sqrt(var + eps)
    return s, beta - mean * s


# --------------------------------------------------------------------------- #
# Fused kernel (whole network in one pallas_call, everything VMEM-resident)
# --------------------------------------------------------------------------- #
def _make_fused_kernel(filter_widths, m_pad, channels, other):
    n_layers = len(filter_widths) - 1

    def mm(a, b):
        # bf16 operands on the MXU, f32 accumulation.
        return jnp.dot(a.astype(_MATMUL_DTYPE), b.astype(_MATMUL_DTYPE),
                       preferred_element_type=jnp.float32)

    def kernel(*refs):
        refs = list(refs)
        x0_ref = refs[0]
        S0_ref, We_ref, be_ref = refs[1], refs[2], refs[3]
        pos = 4
        layer_refs = []
        for _ in range(n_layers):
            layer_refs.append(tuple(refs[pos:pos + 7]))
            pos += 7
        WSH_ref, bSH_ref = refs[pos], refs[pos + 1]
        out_h_ref, out_sh_ref = refs[pos + 2], refs[pos + 3]

        lane = jax.lax.broadcasted_iota(jnp.int32, (1, _LANES), 1)
        mask_x = (lane < channels).astype(jnp.float32)
        mask_a = jnp.logical_and(lane >= channels,
                                 lane < channels + other).astype(jnp.float32)

        WSH = WSH_ref[...]
        bSH = bSH_ref[...]

        # ---- expand conv (both branches fused across the 128 lanes) + BN + ReLU ----
        x0 = x0_ref[...]
        acc = jnp.zeros((m_pad[1], _LANES), jnp.float32)
        for w in range(filter_widths[0]):
            acc = acc + mm(mm(S0_ref[w], x0), We_ref[w])
        h = jnp.maximum(acc + be_ref[...], 0.0)   # lanes [0,64)=x, [64,96)=x_angle, rest 0

        out_sh_ref[0:m_pad[1], :] = mm(h, WSH) + bSH
        off = m_pad[1]

        # ---- residual blocks ----
        for i in range(n_layers):
            S_ref, Wt_ref, bt_ref, WA1_ref, bA1_ref, WX1_ref, bX1_ref = layer_refs[i]
            fw = filter_widths[i + 1]
            m_out = m_pad[i + 2]

            acc = jnp.zeros((m_out, _LANES), jnp.float32)
            res = None
            for w in range(fw):
                rows = mm(S_ref[w], h)            # strided row gather (both branches)
                if w == fw // 2:
                    res = rows                    # residual slice = middle tap (causal_shift=0)
                acc = acc + mm(rows, Wt_ref[w])
            g = jnp.maximum(acc + bt_ref[...], 0.0)          # strided conv + BN + ReLU

            a = jnp.maximum(mm(g, WA1_ref[...]) + bA1_ref[...], 0.0)   # angle 1x1 + BN + ReLU
            x_angle = a + res * mask_a                                  # post-ReLU residual (angle)
            cat = g * mask_x + x_angle                                  # cat(x, x_angle) in lanes
            z = jnp.maximum(mm(cat, WX1_ref[...]) + bX1_ref[...], 0.0)  # x 1x1 (96-in) + BN + ReLU
            h = z + res * mask_x + x_angle                              # residual (x) + carry angle

            out_sh_ref[off:off + m_out, :] = mm(h, WSH) + bSH
            off += m_out

        out_h_ref[...] = h

    return kernel


# --------------------------------------------------------------------------- #
# Parameter preparation: fold BN, pad to lane-dense blocks, build selections
# --------------------------------------------------------------------------- #
def prepare_fused_params(params, filter_widths, B, T, in_channels, channels):
    other = channels // 2
    assert in_channels <= _IN_PAD and channels + other <= _LANES
    T_list, _, M_pad = _static_dims(filter_widths, B, T)

    def sel_matrix(fw, t_in, t_out, m_out_pad, m_in_pad):
        s = np.zeros((fw, m_out_pad, m_in_pad), np.float32)
        for w in range(fw):
            for b in range(B):
                for t in range(t_out):
                    s[w, b * t_out + t, b * t_in + t * fw + w] = 1.0
        return jnp.asarray(s, dtype=_MATMUL_DTYPE)

    ops = []

    # expand conv: x branch -> lanes [0,64), angle branch -> lanes [64,96)
    fw0 = filter_widths[0]
    ops.append(sel_matrix(fw0, T_list[0], T_list[1], M_pad[1], M_pad[0]))
    sx, bx = _bn_affine(params["expand_bn"])
    sa, ba = _bn_affine(params["expand_bn_angle"])
    wx = params["expand_conv"] * sx[:, None, None]
    wa = params["expand_conv_angle"] * sa[:, None, None]
    we = jnp.zeros((fw0, _IN_PAD, _LANES), jnp.float32)
    we = we.at[:, :in_channels, 0:channels].set(jnp.transpose(wx, (2, 1, 0)))
    we = we.at[:, :in_channels, channels:channels + other].set(jnp.transpose(wa, (2, 1, 0)))
    ops.append(we.astype(_MATMUL_DTYPE))
    be = jnp.zeros((1, _LANES), jnp.float32)
    be = be.at[0, 0:channels].set(bx).at[0, channels:channels + other].set(ba)
    ops.append(be)

    # residual blocks
    for i in range(len(filter_widths) - 1):
        fw = filter_widths[i + 1]
        ops.append(sel_matrix(fw, T_list[i + 1], T_list[i + 2], M_pad[i + 2], M_pad[i + 1]))

        s0, b0 = _bn_affine(params["layers_bn"][2 * i])
        sa0, ba0 = _bn_affine(params["layers_bn_angle"][2 * i])
        wc = params["layers_conv"][2 * i] * s0[:, None, None]            # (64, 64, fw)
        wa0 = params["layers_conv_angle"][2 * i] * sa0[:, None, None]    # (32, 32, fw)
        wt = jnp.zeros((fw, _LANES, _LANES), jnp.float32)
        wt = wt.at[:, 0:channels, 0:channels].set(jnp.transpose(wc, (2, 1, 0)))
        wt = wt.at[:, channels:channels + other, channels:channels + other].set(
            jnp.transpose(wa0, (2, 1, 0)))
        ops.append(wt.astype(_MATMUL_DTYPE))
        bt = jnp.zeros((1, _LANES), jnp.float32)
        bt = bt.at[0, 0:channels].set(b0).at[0, channels:channels + other].set(ba0)
        ops.append(bt)

        sa1, ba1 = _bn_affine(params["layers_bn_angle"][2 * i + 1])
        wa1 = params["layers_conv_angle"][2 * i + 1] * sa1[:, None, None]  # (32, 32, 1)
        wA1 = jnp.zeros((_LANES, _LANES), jnp.float32)
        wA1 = wA1.at[channels:channels + other, channels:channels + other].set(wa1[:, :, 0].T)
        ops.append(wA1.astype(_MATMUL_DTYPE))
        bA1 = jnp.zeros((1, _LANES), jnp.float32).at[0, channels:channels + other].set(ba1)
        ops.append(bA1)

        s1, b1 = _bn_affine(params["layers_bn"][2 * i + 1])
        wc1 = params["layers_conv"][2 * i + 1] * s1[:, None, None]         # (64, 96, 1)
        wX1 = jnp.zeros((_LANES, _LANES), jnp.float32)
        wX1 = wX1.at[0:channels + other, 0:channels].set(wc1[:, :, 0].T)
        ops.append(wX1.astype(_MATMUL_DTYPE))
        bX1 = jnp.zeros((1, _LANES), jnp.float32).at[0, 0:channels].set(b1)
        ops.append(bX1)

    # shared shrink head (1x1 on the angle lanes)
    wsh, bsh = params["shrink_angle"]                                      # (48, other, 1), (48,)
    wSH = jnp.zeros((_LANES, _LANES), jnp.float32)
    wSH = wSH.at[channels:channels + other, 0:48].set(wsh[:, :, 0].T)
    ops.append(wSH.astype(_MATMUL_DTYPE))
    bSH = jnp.zeros((1, _LANES), jnp.float32).at[0, 0:48].set(bsh)
    ops.append(bSH)
    return ops


# --------------------------------------------------------------------------- #
# Jitted forward built around the single fused pallas_call
# --------------------------------------------------------------------------- #
def make_temporal_forward(filter_widths, in_channels, channels, B, T):
    other = channels // 2
    T_list, M, M_pad = _static_dims(filter_widths, B, T)
    L = len(filter_widths)
    total_sh = sum(M_pad[1:])

    kernel = _make_fused_kernel(filter_widths, M_pad, channels, other)
    fused_call = pl.pallas_call(
        kernel,
        out_shape=(
            jax.ShapeDtypeStruct((M_pad[L], _LANES), jnp.float32),   # final combined x / x_angle
            jax.ShapeDtypeStruct((total_sh, _LANES), jnp.float32),   # stacked shrink outputs
        ),
    )

    @jax.jit
    def forward(fused_ops, pos_3d, pos_2d, bone_angle):
        feats = jnp.concatenate(
            [pos_3d.reshape(B, T, -1), pos_2d.reshape(B, T, -1),
             bone_angle.reshape(B, T, -1)], axis=-1).astype(jnp.float32)
        rows = feats.reshape(B * T, in_channels)
        x0 = jnp.zeros((M_pad[0], _IN_PAD), jnp.float32)
        x0 = x0.at[:B * T, :in_channels].set(rows)

        h_out, sh_out = fused_call(x0, *fused_ops)

        x_final = h_out[:M[L], :channels].reshape(B, T_list[L], channels)
        x_final = jnp.transpose(x_final, (0, 2, 1))     # (B, channels, T) — PyTorch NCT layout

        angles = []
        off = 0
        for k in range(1, L + 1):
            blk = sh_out[off:off + M[k], :48].reshape(B, T_list[k], 16, 3)
            angles.append(blk)
            off += M_pad[k]
        return x_final, tuple(angles)

    return forward


# --------------------------------------------------------------------------- #
# Parameters (inference-mode BN statistics) and a pure-JAX f32 reference
# --------------------------------------------------------------------------- #
def init_params(key, in_channels, filter_widths, channels=64):
    other = channels // 2
    keys = iter(jax.random.split(key, 128))

    def conv_w(cout, cin, w):
        return jax.random.normal(next(keys), (cout, cin, w), jnp.float32) / jnp.sqrt(float(cin * w))

    def bn(c):
        # (gamma, beta, running_mean, running_var)
        return (
            1.0 + 0.1 * jax.random.normal(next(keys), (c,), jnp.float32),
            0.1 * jax.random.normal(next(keys), (c,), jnp.float32),
            0.1 * jax.random.normal(next(keys), (c,), jnp.float32),
            0.5 + jax.random.uniform(next(keys), (c,), jnp.float32),
        )

    params = {
        "expand_conv": conv_w(channels, in_channels, filter_widths[0]),
        "expand_bn": bn(channels),
        "expand_conv_angle": conv_w(other, in_channels, filter_widths[0]),
        "expand_bn_angle": bn(other),
        "layers_conv": [],
        "layers_bn": [],
        "layers_conv_angle": [],
        "layers_bn_angle": [],
        "shrink_angle": (
            conv_w(16 * 3, other, 1),
            0.01 * jax.random.normal(next(keys), (16 * 3,), jnp.float32),
        ),
    }
    for i in range(1, len(filter_widths)):
        fw = filter_widths[i]
        params["layers_conv"].append(conv_w(channels, channels, fw))
        params["layers_bn"].append(bn(channels))
        params["layers_conv"].append(conv_w(channels, channels + other, 1))
        params["layers_bn"].append(bn(channels))
        params["layers_conv_angle"].append(conv_w(other, other, fw))
        params["layers_bn_angle"].append(bn(other))
        params["layers_conv_angle"].append(conv_w(other, other, 1))
        params["layers_bn_angle"].append(bn(other))
    return params


def reference_forward(params, pos_3d, pos_2d, bone_angle, filter_widths):
    """Pure-JAX float32 reference mirroring the PyTorch module (eval mode)."""
    HI = jax.lax.Precision.HIGHEST
    B, T = pos_3d.shape[:2]
    x = jnp.concatenate([pos_3d.reshape(B, T, -1), pos_2d.reshape(B, T, -1),
                         bone_angle.reshape(B, T, -1)], axis=-1)
    x = jnp.transpose(x, (0, 2, 1))                     # (B, Cin, T)

    def bn(y, p, eps=1e-5):
        g, b, m, v = p
        s = g / jnp.sqrt(v + eps)
        return y * s[None, :, None] + (b - m * s)[None, :, None]

    def conv_strided(y, w):                             # kernel == stride
        Bc, Cin, Tc = y.shape
        _, _, W = w.shape
        To = (Tc - W) // W + 1
        yc = y[:, :, :To * W].reshape(Bc, Cin, To, W)
        return jnp.einsum("bcti,oci->bot", yc, w, precision=HI)

    def conv1(y, w, bias=None):
        out = jnp.einsum("bct,oc->bot", y, w[:, :, 0], precision=HI)
        return out if bias is None else out + bias[None, :, None]

    relu = lambda v: jnp.maximum(v, 0.0)
    x_angle = relu(bn(conv_strided(x, params["expand_conv_angle"]), params["expand_bn_angle"]))
    x = relu(bn(conv_strided(x, params["expand_conv"]), params["expand_bn"]))

    wsh, bsh = params["shrink_angle"]

    def shrink(xa):
        y = conv1(xa, wsh, bsh)
        Bc, _, Tc = y.shape
        return jnp.transpose(y, (0, 2, 1)).reshape(Bc, Tc, 16, 3)

    angles = [shrink(x_angle)]
    for i in range(len(filter_widths) - 1):
        fw = filter_widths[i + 1]
        off = fw // 2
        res = x[:, :, off::fw]
        res_angle = x_angle[:, :, off::fw]
        x_angle = relu(bn(conv_strided(x_angle, params["layers_conv_angle"][2 * i]),
                          params["layers_bn_angle"][2 * i]))
        x_angle = res_angle + relu(bn(conv1(x_angle, params["layers_conv_angle"][2 * i + 1]),
                                      params["layers_bn_angle"][2 * i + 1]))
        angles.append(shrink(x_angle))
        x = relu(bn(conv_strided(x, params["layers_conv"][2 * i]), params["layers_bn"][2 * i]))
        x = jnp.concatenate([x, x_angle], axis=1)
        x = res + relu(bn(conv1(x, params["layers_conv"][2 * i + 1]),
                          params["layers_bn"][2 * i + 1]))
    return x, angles


# --------------------------------------------------------------------------- #
if __name__ == "__main__":
    key = jax.random.PRNGKey(0)
    kp, k3, k2, kb = jax.random.split(key, 4)

    B, T = 2, 27
    V3, C3 = 16, 3   # pos_3d     -> 48 features
    V1, C1 = 17, 2   # pos_2d     -> 34 features
    V2, C2 = 16, 2   # bone_angle -> 32 features
    filter_widths = [3, 3]
    channels = 64
    in_channels = V3 * C3 + V1 * C1 + V2 * C2  # 114

    params = init_params(kp, in_channels, filter_widths, channels)
    fused = prepare_fused_params(params, filter_widths, B, T, in_channels, channels)
    forward = make_temporal_forward(filter_widths, in_channels, channels, B, T)

    pos_3d = jax.random.normal(k3, (B, T, V3, C3), jnp.float32)
    pos_2d = jax.random.normal(k2, (B, T, V1, C1), jnp.float32)
    bone_angle = jax.random.normal(kb, (B, T, V2, C2), jnp.float32)

    x_out, angles = forward(fused, pos_3d, pos_2d, bone_angle)
    jax.block_until_ready(x_out)
    for a in angles:
        jax.block_until_ready(a)

    # Correctness check against a pure-JAX float32 reference (bf16 MXU operands
    # in the kernel -> allow a loose, scale-relative tolerance).
    x_ref, angles_ref = reference_forward(params, pos_3d, pos_2d, bone_angle, filter_widths)

    def max_rel_err(a, b):
        return float(jnp.max(jnp.abs(a - b)) / (jnp.max(jnp.abs(b)) + 1e-6))

    errs = [max_rel_err(x_out, x_ref)]
    errs += [max_rel_err(a, b) for a, b in zip(angles, angles_ref)]
    assert max(errs) < 8e-2, f"numerical mismatch vs reference: {errs}"

    # x_out: (B, channels, 3); angles: ((B, 9, 16, 3), (B, 3, 16, 3))
    print("KERNEL_OK")
</pallas_src>

<mosaic_0001>
module attributes {stable_mosaic.version = 11 : i64} {
  func.func @kernel(%arg0: memref<56x128xf32, #tpu.memory_space<vmem>>, %arg1: memref<3x24x56xbf16, #tpu.memory_space<vmem>>, %arg2: memref<3x128x128xbf16, #tpu.memory_space<vmem>>, %arg3: memref<1x128xf32, #tpu.memory_space<vmem>>, %arg4: memref<3x8x24xbf16, #tpu.memory_space<vmem>>, %arg5: memref<3x128x128xbf16, #tpu.memory_space<vmem>>, %arg6: memref<1x128xf32, #tpu.memory_space<vmem>>, %arg7: memref<128x128xbf16, #tpu.memory_space<vmem>>, %arg8: memref<1x128xf32, #tpu.memory_space<vmem>>, %arg9: memref<128x128xbf16, #tpu.memory_space<vmem>>, %arg10: memref<1x128xf32, #tpu.memory_space<vmem>>, %arg11: memref<128x128xbf16, #tpu.memory_space<vmem>>, %arg12: memref<1x128xf32, #tpu.memory_space<vmem>>, %arg13: memref<8x128xf32, #tpu.memory_space<vmem>>, %arg14: memref<32x128xf32, #tpu.memory_space<vmem>>) attributes {dimension_semantics = [], scalar_prefetch = 0 : i64, scratch_operands = 0 : i64, tpu.core_type = #tpu.core_type<tc>} {
    %0 = tpu.iota {dimensions = array<i32: 1>} : vector<1x128xi32>
    %c64_i32 = arith.constant 64 : i32
    %1 = vector.broadcast %c64_i32 : i32 to vector<1x128xi32>
    %2 = arith.cmpi slt, %0, %1 : vector<1x128xi32>
    %3 = arith.extui %2 : vector<1x128xi1> to vector<1x128xi32>
    %4 = arith.sitofp %3 : vector<1x128xi32> to vector<1x128xf32>
    %c64_i32_0 = arith.constant 64 : i32
    %5 = vector.broadcast %c64_i32_0 : i32 to vector<1x128xi32>
    %6 = arith.cmpi sge, %0, %5 : vector<1x128xi32>
    %c96_i32 = arith.constant 96 : i32
    %7 = vector.broadcast %c96_i32 : i32 to vector<1x128xi32>
    %8 = arith.cmpi slt, %0, %7 : vector<1x128xi32>
    %9 = arith.andi %6, %8 : vector<1x128xi1>
    %10 = arith.extui %9 : vector<1x128xi1> to vector<1x128xi32>
    %11 = arith.sitofp %10 : vector<1x128xi32> to vector<1x128xf32>
    %c0 = arith.constant 0 : index
    %c0_1 = arith.constant 0 : index
    %12 = vector.load %arg11[%c0, %c0_1] : memref<128x128xbf16, #tpu.memory_space<vmem>>, vector<128x128xbf16>
    %c0_2 = arith.constant 0 : index
    %c0_3 = arith.constant 0 : index
    %13 = vector.load %arg12[%c0_2, %c0_3] : memref<1x128xf32, #tpu.memory_space<vmem>>, vector<1x128xf32>
    %c0_4 = arith.constant 0 : index
    %c0_5 = arith.constant 0 : index
    %14 = vector.load %arg0[%c0_4, %c0_5] : memref<56x128xf32, #tpu.memory_space<vmem>>, vector<56x128xf32>
    %cst = arith.constant 0.000000e+00 : f32
    %15 = vector.broadcast %cst : f32 to vector<24x128xf32>
    %c0_6 = arith.constant 0 : index
    %c0_7 = arith.constant 0 : index
    %c0_8 = arith.constant 0 : index
    %16 = vector.load %arg1[%c0_6, %c0_7, %c0_8] : memref<3x24x56xbf16, #tpu.memory_space<vmem>>, vector<1x24x56xbf16>
    %17 = vector.shape_cast %16 : vector<1x24x56xbf16> to vector<24x56xbf16>
    %18 = arith.truncf %14 : vector<56x128xf32> to vector<56x128xbf16>
    %cst_9 = arith.constant dense<0.000000e+00> : vector<24x128xf32>
    %19 = tpu.matmul %17, %18, %cst_9 {dimension_numbers = #tpu.dot_dimension_numbers<[1], [0], [0], [1], [0, 0, 1, 1], [], []>} : vector<24x56xbf16>, vector<56x128xbf16>, vector<24x128xf32> -> vector<24x128xf32>
    %c0_10 = arith.constant 0 : index
    %c0_11 = arith.constant 0 : index
    %c0_12 = arith.constant 0 : index
    %20 = vector.load %arg2[%c0_10, %c0_11, %c0_12] : memref<3x128x128xbf16, #tpu.memory_space<vmem>>, vector<1x128x128xbf16>
    %21 = vector.shape_cast %20 : vector<1x128x128xbf16> to vector<128x128xbf16>
    %22 = arith.truncf %19 : vector<24x128xf32> to vector<24x128xbf16>
    %cst_13 = arith.constant dense<0.000000e+00> : vector<24x128xf32>
    %23 = tpu.matmul %22, %21, %cst_13 {dimension_numbers = #tpu.dot_dimension_numbers<[1], [0], [0], [1], [0, 0, 1, 1], [], []>} : vector<24x128xbf16>, vector<128x128xbf16>, vector<24x128xf32> -> vector<24x128xf32>
    %24 = arith.addf %15, %23 : vector<24x128xf32>
    %c1 = arith.constant 1 : index
    %c0_14 = arith.constant 0 : index
    %c0_15 = arith.constant 0 : index
    %25 = vector.load %arg1[%c1, %c0_14, %c0_15] : memref<3x24x56xbf16, #tpu.memory_space<vmem>>, vector<1x24x56xbf16>
    %26 = vector.shape_cast %25 : vector<1x24x56xbf16> to vector<24x56xbf16>
    %27 = arith.truncf %14 : vector<56x128xf32> to vector<56x128xbf16>
    %cst_16 = arith.constant dense<0.000000e+00> : vector<24x128xf32>
    %28 = tpu.matmul %26, %27, %cst_16 {dimension_numbers = #tpu.dot_dimension_numbers<[1], [0], [0], [1], [0, 0, 1, 1], [], []>} : vector<24x56xbf16>, vector<56x128xbf16>, vector<24x128xf32> -> vector<24x128xf32>
    %c1_17 = arith.constant 1 : index
    %c0_18 = arith.constant 0 : index
    %c0_19 = arith.constant 0 : index
    %29 = vector.load %arg2[%c1_17, %c0_18, %c0_19] : memref<3x128x128xbf16, #tpu.memory_space<vmem>>, vector<1x128x128xbf16>
    %30 = vector.shape_cast %29 : vector<1x128x128xbf16> to vector<128x128xbf16>
    %31 = arith.truncf %28 : vector<24x128xf32> to vector<24x128xbf16>
    %cst_20 = arith.constant dense<0.000000e+00> : vector<24x128xf32>
    %32 = tpu.matmul %31, %30, %cst_20 {dimension_numbers = #tpu.dot_dimension_numbers<[1], [0], [0], [1], [0, 0, 1, 1], [], []>} : vector<24x128xbf16>, vector<128x128xbf16>, vector<24x128xf32> -> vector<24x128xf32>
    %33 = arith.addf %24, %32 : vector<24x128xf32>
    %c2 = arith.constant 2 : index
    %c0_21 = arith.constant 0 : index
    %c0_22 = arith.constant 0 : index
    %34 = vector.load %arg1[%c2, %c0_21, %c0_22] : memref<3x24x56xbf16, #tpu.memory_space<vmem>>, vector<1x24x56xbf16>
    %35 = vector.shape_cast %34 : vector<1x24x56xbf16> to vector<24x56xbf16>
    %36 = arith.truncf %14 : vector<56x128xf32> to vector<56x128xbf16>
    %cst_23 = arith.constant dense<0.000000e+00> : vector<24x128xf32>
    %37 = tpu.matmul %35, %36, %cst_23 {dimension_numbers = #tpu.dot_dimension_numbers<[1], [0], [0], [1], [0, 0, 1, 1], [], []>} : vector<24x56xbf16>, vector<56x128xbf16>, vector<24x128xf32> -> vector<24x128xf32>
    %c2_24 = arith.constant 2 : index
    %c0_25 = arith.constant 0 : index
    %c0_26 = arith.constant 0 : index
    %38 = vector.load %arg2[%c2_24, %c0_25, %c0_26] : memref<3x128x128xbf16, #tpu.memory_space<vmem>>, vector<1x128x128xbf16>
    %39 = vector.shape_cast %38 : vector<1x128x128xbf16> to vector<128x128xbf16>
    %40 = arith.truncf %37 : vector<24x128xf32> to vector<24x128xbf16>
    %cst_27 = arith.constant dense<0.000000e+00> : vector<24x128xf32>
    %41 = tpu.matmul %40, %39, %cst_27 {dimension_numbers = #tpu.dot_dimension_numbers<[1], [0], [0], [1], [0, 0, 1, 1], [], []>} : vector<24x128xbf16>, vector<128x128xbf16>, vector<24x128xf32> -> vector<24x128xf32>
    %42 = arith.addf %33, %41 : vector<24x128xf32>
    %c0_28 = arith.constant 0 : index
    %c0_29 = arith.constant 0 : index
    %43 = vector.load %arg3[%c0_28, %c0_29] : memref<1x128xf32, #tpu.memory_space<vmem>>, vector<1x128xf32>
    %44 = vector.broadcast %43 : vector<1x128xf32> to vector<24x128xf32>
    %45 = arith.addf %42, %44 : vector<24x128xf32>
    %cst_30 = arith.constant 0.000000e+00 : f32
    %46 = vector.broadcast %cst_30 : f32 to vector<24x128xf32>
    %47 = arith.maximumf %45, %46 : vector<24x128xf32>
    %48 = arith.truncf %47 : vector<24x128xf32> to vector<24x128xbf16>
    %cst_31 = arith.constant dense<0.000000e+00> : vector<24x128xf32>
    %49 = tpu.matmul %48, %12, %cst_31 {dimension_numbers = #tpu.dot_dimension_numbers<[1], [0], [0], [1], [0, 0, 1, 1], [], []>} : vector<24x128xbf16>, vector<128x128xbf16>, vector<24x128xf32> -> vector<24x128xf32>
    %50 = vector.broadcast %13 : vector<1x128xf32> to vector<24x128xf32>
    %51 = arith.addf %49, %50 : vector<24x128xf32>
    %c0_32 = arith.constant 0 : index
    %c0_33 = arith.constant 0 : index
    %52 = vector.load %arg14[%c0_32, %c0_33] : memref<32x128xf32, #tpu.memory_space<vmem>>, vector<24x128xf32>
    tpu.vector_store %arg14[%c0_32, %c0_33], %51 {strides = array<i32>} : memref<32x128xf32, #tpu.memory_space<vmem>>, vector<24x128xf32>,
    %cst_34 = arith.constant 0.000000e+00 : f32
    %53 = vector.broadcast %cst_34 : f32 to vector<8x128xf32>
    %c0_35 = arith.constant 0 : index
    %c0_36 = arith.constant 0 : index
    %c0_37 = arith.constant 0 : index
    %54 = vector.load %arg4[%c0_35, %c0_36, %c0_37] : memref<3x8x24xbf16, #tpu.memory_space<vmem>>, vector<1x8x24xbf16>
    %55 = vector.shape_cast %54 : vector<1x8x24xbf16> to vector<8x24xbf16>
    %56 = arith.truncf %47 : vector<24x128xf32> to vector<24x128xbf16>
    %cst_38 = arith.constant dense<0.000000e+00> : vector<8x128xf32>
    %57 = tpu.matmul %55, %56, %cst_38 {dimension_numbers = #tpu.dot_dimension_numbers<[1], [0], [0], [1], [0, 0, 1, 1], [], []>} : vector<8x24xbf16>, vector<24x128xbf16>, vector<8x128xf32> -> vector<8x128xf32>
    %c0_39 = arith.constant 0 : index
    %c0_40 = arith.constant 0 : index
    %c0_41 = arith.constant 0 : index
    %58 = vector.load %arg5[%c0_39, %c0_40, %c0_41] : memref<3x128x128xbf16, #tpu.memory_space<vmem>>, vector<1x128x128xbf16>
    %59 = vector.shape_cast %58 : vector<1x128x128xbf16> to vector<128x128xbf16>
    %60 = arith.truncf %57 : vector<8x128xf32> to vector<8x128xbf16>
    %cst_42 = arith.constant dense<0.000000e+00> : vector<8x128xf32>
    %61 = tpu.matmul %60, %59, %cst_42 {dimension_numbers = #tpu.dot_dimension_numbers<[1], [0], [0], [1], [0, 0, 1, 1], [], []>} : vector<8x128xbf16>, vector<128x128xbf16>, vector<8x128xf32> -> vector<8x128xf32>
    %62 = arith.addf %53, %61 : vector<8x128xf32>
    %c1_43 = arith.constant 1 : index
    %c0_44 = arith.constant 0 : index
    %c0_45 = arith.constant 0 : index
    %63 = vector.load %arg4[%c1_43, %c0_44, %c0_45] : memref<3x8x24xbf16, #tpu.memory_space<vmem>>, vector<1x8x24xbf16>
    %64 = vector.shape_cast %63 : vector<1x8x24xbf16> to vector<8x24xbf16>
    %65 = arith.truncf %47 : vector<24x128xf32> to vector<24x128xbf16>
    %cst_46 = arith.constant dense<0.000000e+00> : vector<8x128xf32>
    %66 = tpu.matmul %64, %65, %cst_46 {dimension_numbers = #tpu.dot_dimension_numbers<[1], [0], [0], [1], [0, 0, 1, 1], [], []>} : vector<8x24xbf16>, vector<24x128xbf16>, vector<8x128xf32> -> vector<8x128xf32>
    %c1_47 = arith.constant 1 : index
    %c0_48 = arith.constant 0 : index
    %c0_49 = arith.constant 0 : index
    %67 = vector.load %arg5[%c1_47, %c0_48, %c0_49] : memref<3x128x128xbf16, #tpu.memory_space<vmem>>, vector<1x128x128xbf16>
    %68 = vector.shape_cast %67 : vector<1x128x128xbf16> to vector<128x128xbf16>
    %69 = arith.truncf %66 : vector<8x128xf32> to vector<8x128xbf16>
    %cst_50 = arith.constant dense<0.000000e+00> : vector<8x128xf32>
    %70 = tpu.matmul %69, %68, %cst_50 {dimension_numbers = #tpu.dot_dimension_numbers<[1], [0], [0], [1], [0, 0, 1, 1], [], []>} : vector<8x128xbf16>, vector<128x128xbf16>, vector<8x128xf32> -> vector<8x128xf32>
    %71 = arith.addf %62, %70 : vector<8x128xf32>
    %c2_51 = arith.constant 2 : index
    %c0_52 = arith.constant 0 : index
    %c0_53 = arith.constant 0 : index
    %72 = vector.load %arg4[%c2_51, %c0_52, %c0_53] : memref<3x8x24xbf16, #tpu.memory_space<vmem>>, vector<1x8x24xbf16>
    %73 = vector.shape_cast %72 : vector<1x8x24xbf16> to vector<8x24xbf16>
    %74 = arith.truncf %47 : vector<24x128xf32> to vector<24x128xbf16>
    %cst_54 = arith.constant dense<0.000000e+00> : vector<8x128xf32>
    %75 = tpu.matmul %73, %74, %cst_54 {dimension_numbers = #tpu.dot_dimension_numbers<[1], [0], [0], [1], [0, 0, 1, 1], [], []>} : vector<8x24xbf16>, vector<24x128xbf16>, vector<8x128xf32> -> vector<8x128xf32>
    %c2_55 = arith.constant 2 : index
    %c0_56 = arith.constant 0 : index
    %c0_57 = arith.constant 0 : index
    %76 = vector.load %arg5[%c2_55, %c0_56, %c0_57] : memref<3x128x128xbf16, #tpu.memory_space<vmem>>, vector<1x128x128xbf16>
    %77 = vector.shape_cast %76 : vector<1x128x128xbf16> to vector<128x128xbf16>
    %78 = arith.truncf %75 : vector<8x128xf32> to vector<8x128xbf16>
    %cst_58 = arith.constant dense<0.000000e+00> : vector<8x128xf32>
    %79 = tpu.matmul %78, %77, %cst_58 {dimension_numbers = #tpu.dot_dimension_numbers<[1], [0], [0], [1], [0, 0, 1, 1], [], []>} : vector<8x128xbf16>, vector<128x128xbf16>, vector<8x128xf32> -> vector<8x128xf32>
    %80 = arith.addf %71, %79 : vector<8x128xf32>
    %c0_59 = arith.constant 0 : index
    %c0_60 = arith.constant 0 : index
    %81 = vector.load %arg6[%c0_59, %c0_60] : memref<1x128xf32, #tpu.memory_space<vmem>>, vector<1x128xf32>
    %82 = vector.broadcast %81 : vector<1x128xf32> to vector<8x128xf32>
    %83 = arith.addf %80, %82 : vector<8x128xf32>
    %cst_61 = arith.constant 0.000000e+00 : f32
    %84 = vector.broadcast %cst_61 : f32 to vector<8x128xf32>
    %85 = arith.maximumf %83, %84 : vector<8x128xf32>
    %c0_62 = arith.constant 0 : index
    %c0_63 = arith.constant 0 : index
    %86 = vector.load %arg7[%c0_62, %c0_63] : memref<128x128xbf16, #tpu.memory_space<vmem>>, vector<128x128xbf16>
    %87 = arith.truncf %85 : vector<8x128xf32> to vector<8x128xbf16>
    %cst_64 = arith.constant dense<0.000000e+00> : vector<8x128xf32>
    %88 = tpu.matmul %87, %86, %cst_64 {dimension_numbers = #tpu.dot_dimension_numbers<[1], [0], [0], [1], [0, 0, 1, 1], [], []>} : vector<8x128xbf16>, vector<128x128xbf16>, vector<8x128xf32> -> vector<8x128xf32>
    %c0_65 = arith.constant 0 : index
    %c0_66 = arith.constant 0 : index
    %89 = vector.load %arg8[%c0_65, %c0_66] : memref<1x128xf32, #tpu.memory_space<vmem>>, vector<1x128xf32>
    %90 = vector.broadcast %89 : vector<1x128xf32> to vector<8x128xf32>
    %91 = arith.addf %88, %90 : vector<8x128xf32>
    %cst_67 = arith.constant 0.000000e+00 : f32
    %92 = vector.broadcast %cst_67 : f32 to vector<8x128xf32>
    %93 = arith.maximumf %91, %92 : vector<8x128xf32>
    %94 = vector.broadcast %11 : vector<1x128xf32> to vector<8x128xf32>
    %95 = arith.mulf %66, %94 : vector<8x128xf32>
    %96 = arith.addf %93, %95 : vector<8x128xf32>
    %97 = vector.broadcast %4 : vector<1x128xf32> to vector<8x128xf32>
    %98 = arith.mulf %85, %97 : vector<8x128xf32>
    %99 = arith.addf %98, %96 : vector<8x128xf32>
    %c0_68 = arith.constant 0 : index
    %c0_69 = arith.constant 0 : index
    %100 = vector.load %arg9[%c0_68, %c0_69] : memref<128x128xbf16, #tpu.memory_space<vmem>>, vector<128x128xbf16>
    %101 = arith.truncf %99 : vector<8x128xf32> to vector<8x128xbf16>
    %cst_70 = arith.constant dense<0.000000e+00> : vector<8x128xf32>
    %102 = tpu.matmul %101, %100, %cst_70 {dimension_numbers = #tpu.dot_dimension_numbers<[1], [0], [0], [1], [0, 0, 1, 1], [], []>} : vector<8x128xbf16>, vector<128x128xbf16>, vector<8x128xf32> -> vector<8x128xf32>
    %c0_71 = arith.constant 0 : index
    %c0_72 = arith.constant 0 : index
    %103 = vector.load %arg10[%c0_71, %c0_72] : memref<1x128xf32, #tpu.memory_space<vmem>>, vector<1x128xf32>
    %104 = vector.broadcast %103 : vector<1x128xf32> to vector<8x128xf32>
    %105 = arith.addf %102, %104 : vector<8x128xf32>
    %cst_73 = arith.constant 0.000000e+00 : f32
    %106 = vector.broadcast %cst_73 : f32 to vector<8x128xf32>
    %107 = arith.maximumf %105, %106 : vector<8x128xf32>
    %108 = vector.broadcast %4 : vector<1x128xf32> to vector<8x128xf32>
    %109 = arith.mulf %66, %108 : vector<8x128xf32>
    %110 = arith.addf %107, %109 : vector<8x128xf32>
    %111 = arith.addf %110, %96 : vector<8x128xf32>
    %112 = arith.truncf %111 : vector<8x128xf32> to vector<8x128xbf16>
    %cst_74 = arith.constant dense<0.000000e+00> : vector<8x128xf32>
    %113 = tpu.matmul %112, %12, %cst_74 {dimension_numbers = #tpu.dot_dimension_numbers<[1], [0], [0], [1], [0, 0, 1, 1], [], []>} : vector<8x128xbf16>, vector<128x128xbf16>, vector<8x128xf32> -> vector<8x128xf32>
    %114 = vector.broadcast %13 : vector<1x128xf32> to vector<8x128xf32>
    %115 = arith.addf %113, %114 : vector<8x128xf32>
    %c24 = arith.constant 24 : index
    %c0_75 = arith.constant 0 : index
    %116 = vector.load %arg14[%c24, %c0_75] : memref<32x128xf32, #tpu.memory_space<vmem>>, vector<8x128xf32>
    tpu.vector_store %arg14[%c24, %c0_75], %115 {strides = array<i32>} : memref<32x128xf32, #tpu.memory_space<vmem>>, vector<8x128xf32>,
    %c0_76 = arith.constant 0 : index
    %c0_77 = arith.constant 0 : index
    %117 = vector.load %arg13[%c0_76, %c0_77] : memref<8x128xf32, #tpu.memory_space<vmem>>, vector<8x128xf32>
    tpu.vector_store %arg13[%c0_76, %c0_77], %111 {strides = array<i32>} : memref<8x128xf32, #tpu.memory_space<vmem>>, vector<8x128xf32>,
    return
  }
}

</mosaic_0001>

<llo_original>
// kernel: forward.1
$region0: #{forward.1}
  #allocation0 [shape = 'u32[]', space=smem, size = 0x4, offset = 0x4, fixed_abs, tag = 'smem constant byte address 0x4 - core index']
  #allocation1 [shape = 'u32[144,128]{1,0:T(1,128)}', space=vmem, size = 0x12000, scoped, tag = 'internal scratch']
  %s0 = inlined_call_operand.vmem [shape: f32[56,128], index: 0, kind: input, shape index: {}]
  %s1 = inlined_call_operand.vmem [shape: bf16[3,24,56], index: 1, kind: input, shape index: {}]
  %s2 = inlined_call_operand.vmem [shape: bf16[3,128,128], index: 2, kind: input, shape index: {}]
  %s3 = inlined_call_operand.vmem [shape: f32[1,128], index: 3, kind: input, shape index: {}]
  %s4 = inlined_call_operand.vmem [shape: bf16[3,8,24], index: 4, kind: input, shape index: {}]
  %s5 = inlined_call_operand.vmem [shape: bf16[3,128,128], index: 5, kind: input, shape index: {}]
  %s6 = inlined_call_operand.vmem [shape: f32[1,128], index: 6, kind: input, shape index: {}]
  %s7 = inlined_call_operand.vmem [shape: bf16[128,128], index: 7, kind: input, shape index: {}]
  %s8 = inlined_call_operand.vmem [shape: f32[1,128], index: 8, kind: input, shape index: {}]
  %s9 = inlined_call_operand.vmem [shape: bf16[128,128], index: 9, kind: input, shape index: {}]
  %s10 = inlined_call_operand.vmem [shape: f32[1,128], index: 10, kind: input, shape index: {}]
  %s11 = inlined_call_operand.vmem [shape: bf16[128,128], index: 11, kind: input, shape index: {}]
  %s12 = inlined_call_operand.vmem [shape: f32[1,128], index: 12, kind: input, shape index: {}]
  %s13 = inlined_call_operand.vmem [shape: f32[8,128], index: 13, kind: output, shape index: {0}]
  %s14 = inlined_call_operand.vmem [shape: f32[32,128], index: 14, kind: output, shape index: {1}]
  %15 = xla_tuple %s13, %s14
  %s16 = sld [smem:[#allocation0]]
  $region70: #{forward.1} parent=0
    _
  %s18 = ssub.s32 1, %s16
  %s19 = scalar_select 0, %s18, %s16
  // Predicated region
  $region2: #{forward.1} parent=0 // pred_check
    _
  $region3: #{forward.1} parent=0 // pred_check_branch
    %21 = sbr.rel (0) target = $region5
  $region4: #{forward.1} parent=0 // pred_region
    _
  $region5: #{forward.1} parent=0 // pred_fallthru
    _
  // Predicated region
  $region6: #{forward.1} parent=0 // pred_check
    _
  $region7: #{forward.1} parent=0 // pred_check_branch
    %23 = sbr.rel (0) target = $region9
  $region8: #{forward.1} parent=0 // pred_region
    _
  $region9: #{forward.1} parent=0 // pred_fallthru
    _
  // Predicated region
  $region10: #{forward.1} parent=0 // pred_check
    _
  $region11: #{forward.1} parent=0 // pred_check_branch
    %25 = sbr.rel (0) target = $region13
  $region12: #{forward.1} parent=0 // pred_region
    _
  $region13: #{forward.1} parent=0 // pred_fallthru
    _
  // Predicated region
  $region14: #{forward.1} parent=0 // pred_check
    _
  $region15: #{forward.1} parent=0 // pred_check_branch
    %27 = sbr.rel (0) target = $region17
  $region16: #{forward.1} parent=0 // pred_region
    _
  $region17: #{forward.1} parent=0 // pred_fallthru
    _
  // Predicated region
  $region18: #{forward.1} parent=0 // pred_check
    _
  $region19: #{forward.1} parent=0 // pred_check_branch
    %29 = sbr.rel (0) target = $region21
  $region20: #{forward.1} parent=0 // pred_region
    _
  $region21: #{forward.1} parent=0 // pred_fallthru
    _
  // Predicated region
  $region22: #{forward.1} parent=0 // pred_check
    _
  $region23: #{forward.1} parent=0 // pred_check_branch
    %31 = sbr.rel (0) target = $region25
  $region24: #{forward.1} parent=0 // pred_region
    _
  $region25: #{forward.1} parent=0 // pred_fallthru
    _
  // Predicated region
  $region26: #{forward.1} parent=0 // pred_check
    _
  $region27: #{forward.1} parent=0 // pred_check_branch
    %33 = sbr.rel (0) target = $region29
  $region28: #{forward.1} parent=0 // pred_region
    _
  $region29: #{forward.1} parent=0 // pred_fallthru
    _
  // Predicated region
  $region30: #{forward.1} parent=0 // pred_check
    _
  $region31: #{forward.1} parent=0 // pred_check_branch
    %35 = sbr.rel (0) target = $region33
  $region32: #{forward.1} parent=0 // pred_region
    _
  $region33: #{forward.1} parent=0 // pred_fallthru
    _
  // Predicated region
  $region34: #{forward.1} parent=0 // pred_check
    _
  $region35: #{forward.1} parent=0 // pred_check_branch
    %37 = sbr.rel (0) target = $region37
  $region36: #{forward.1} parent=0 // pred_region
    _
  $region37: #{forward.1} parent=0 // pred_fallthru
    _
  // Predicated region
  $region38: #{forward.1} parent=0 // pred_check
    _
  $region39: #{forward.1} parent=0 // pred_check_branch
    %39 = sbr.rel (0) target = $region41
  $region40: #{forward.1} parent=0 // pred_region
    _
  $region41: #{forward.1} parent=0 // pred_fallthru
    _
  // Predicated region
  $region42: #{forward.1} parent=0 // pred_check
    _
  $region43: #{forward.1} parent=0 // pred_check_branch
    %41 = sbr.rel (0) target = $region45
  $region44: #{forward.1} parent=0 // pred_region
    _
  $region45: #{forward.1} parent=0 // pred_fallthru
    _
  // Predicated region
  $region46: #{forward.1} parent=0 // pred_check
    _
  $region47: #{forward.1} parent=0 // pred_check_branch
    %43 = sbr.rel (0) target = $region49
  $region48: #{forward.1} parent=0 // pred_region
    _
  $region49: #{forward.1} parent=0 // pred_fallthru
    _
  // Predicated region
  $region50: #{forward.1} parent=0 // pred_check
    _
  $region51: #{forward.1} parent=0 // pred_check_branch
    %45 = sbr.rel (0) target = $region53
  $region52: #{forward.1} parent=0 // pred_region
    _
  $region53: #{forward.1} parent=0 // pred_fallthru
    _
  %v47 = vlaneseq
  %v48 = vand.u32 %v47, 127
  %vm49 = vcmp.lt.s32.totalorder %v48, 64
  %v50 = vsel %vm49, 1, 0
  %v51 = vcvt.s32.f32 %v50
  %vm52 = vcmp.ge.s32.totalorder %v48, 64
  %vm53 = vcmp.lt.s32.totalorder %v48, 96
  %vm54 = vmand %vm52, %vm53
  %v55 = vsel %vm54, 1, 0
  %v56 = vcvt.s32.f32 %v55
  %v57 = vld [vmem:[%s11] sm:$0xf]
  %v58 = vld [vmem:[%s11 + $0x4] sm:$0xf]
  %v59 = vld [vmem:[%s11 + $0x8] sm:$0xf]
  %v60 = vld [vmem:[%s11 + $0xc] sm:$0xf]
  %v61 = vld [vmem:[%s11 + $0x10] sm:$0xf]
  %v62 = vld [vmem:[%s11 + $0x14] sm:$0xf]
  %v63 = vld [vmem:[%s11 + $0x18] sm:$0xf]
  %v64 = vld [vmem:[%s11 + $0x1c] sm:$0xf]
  %v65 = vld [vmem:[%s11 + $0x20] sm:$0xf]
  %v66 = vld [vmem:[%s11 + $0x24] sm:$0xf]
  %v67 = vld [vmem:[%s11 + $0x28] sm:$0xf]
  %v68 = vld [vmem:[%s11 + $0x2c] sm:$0xf]
  %v69 = vld [vmem:[%s11 + $0x30] sm:$0xf]
  %v70 = vld [vmem:[%s11 + $0x34] sm:$0xf]
  %v71 = vld [vmem:[%s11 + $0x38] sm:$0xf]
  %v72 = vld [vmem:[%s11 + $0x3c] sm:$0xf]
  %v73 = vld [vmem:[%s12] sm:$0x1]
  %v74 = vld [vmem:[%s0] sm:$0xff]
  %v75 = vld [vmem:[%s0 + $0x8] sm:$0xff]
  %v76 = vld [vmem:[%s0 + $0x10] sm:$0xff]
  %v77 = vld [vmem:[%s0 + $0x18] sm:$0xff]
  %v78 = vld [vmem:[%s0 + $0x20] sm:$0xff]
  %v79 = vld [vmem:[%s0 + $0x28] sm:$0xff]
  %v80 = vld [vmem:[%s0 + $0x30] sm:$0xff]
  %v81 = vld [vmem:[%s1] sm:$0xf]
  %v82 = vld [vmem:[%s1 + $0x4] sm:$0xf]
  %v83 = vld [vmem:[%s1 + $0x8] sm:$0xf]
  %v84 = vpack.c.bf16 %v75, %v74
  %v85 = vpack.c.bf16 %v77, %v76
  %v86 = vpack.c.bf16 %v79, %v78
  %v87 = vpack.c.bf16 %v80, %v80
  %v91 = vunpack.c.l.b16 %v81
  %v92 = vunpack.c.l.b16 %v82
  %v93 = vunpack.c.l.b16 %v83
  %v94 = vpack.c.b16 %v92, %v91
  %v95 = vpack.c.b16 %v93, %v93
  %vm96 = vcmask 457728
  %v98 = vsel %vm96, %v94, 0
  %v101 = vsel %vm96, %v95, 0
  %vm103 = vcmask 1043456
  %v105 = vsel %vm103, %v87, 0
  %107 = vmatprep.subr.bf16.mxu0 0
  %108 = vmatpush1.bf16.msra.mxu0 0
  %109 = vmatprep.subr.bf16.mxu0 0
  %110 = vmatpush1.bf16.msra.mxu0 0
  %111 = vmatprep.subr.bf16.mxu0 0
  %112 = vmatpush1.bf16.msra.mxu0 0
  %113 = vmatprep.subr.bf16.mxu0 0
  %114 = vmatpush1.bf16.msra.mxu0 0
  %115 = vmatprep.subr.bf16.mxu0 0
  %116 = vmatpush1.bf16.msra.mxu0 %v105
  %117 = vmatprep.subr.bf16.mxu0 0
  %118 = vmatpush1.bf16.msra.mxu0 %v86
  %119 = vmatprep.subr.bf16.mxu0 0
  %120 = vmatpush1.bf16.msra.mxu0 %v85
  %121 = vmatprep.subr.bf16.mxu0 0
  %122 = vmatpush1.bf16.msra.mxu0 %v84
  %123 = vmatprep.subr.bf16.mxu0 0
  %124 = vmatpush2.bf16.msra.mxu0 0
  %125 = vmatprep.subr.bf16.mxu0 0
  %126 = vmatpush2.bf16.msra.mxu0 0
  %127 = vmatprep.subr.bf16.mxu0 0
  %128 = vmatpush2.bf16.msra.mxu0 0
  %129 = vmatprep.subr.bf16.mxu0 0
  %130 = vmatpush2.bf16.msra.mxu0 0
  %131 = vmatprep.subr.bf16.mxu0 0
  %132 = vmatpush2.bf16.msra.mxu0 0
  %133 = vmatprep.subr.bf16.mxu0 0
  %134 = vmatpush2.bf16.msra.mxu0 0
  %135 = vmatprep.subr.bf16.mxu0 0
  %136 = vmatpush2.bf16.msra.mxu0 0
  %137 = vmatprep.subr.bf16.mxu0 0
  %138 = vmatpush2.bf16.msra.mxu0 0
  %139 = vmatprep.mubr.bf16.mxu0 0
  %140 = vmatmul.mubr.bf16.gmra.mxu0 %v98
  %v141 = vpop.f32.mrf.mxu0
  %v142 = vadd.f32 0.0, %v141
  %v143 = vpop.f32.mrf.mxu0
  %v144 = vpop.f32.mrf.mxu0
  %v145 = vadd.f32 0.0, %v144
  %v146 = vpop.f32.mrf.mxu0
  %147 = vmatprep.mubr.bf16.mxu0 0
  %148 = vmatmul.mubr.bf16.gmra.mxu0 %v101
  %v149 = vpop.f32.mrf.mxu0
  %v150 = vadd.f32 0.0, %v149
  %v151 = vpop.f32.mrf.mxu0
  %v152 = vpop.f32.mrf.mxu0
  %v153 = vpop.f32.mrf.mxu0
  %154 = vdwg.mxu0
  %v155 = vld [vmem:[%s2] sm:$0xf]
  %v156 = vld [vmem:[%s2 + $0x4] sm:$0xf]
  %v157 = vld [vmem:[%s2 + $0x8] sm:$0xf]
  %v158 = vld [vmem:[%s2 + $0xc] sm:$0xf]
  %v159 = vld [vmem:[%s2 + $0x10] sm:$0xf]
  %v160 = vld [vmem:[%s2 + $0x14] sm:$0xf]
  %v161 = vld [vmem:[%s2 + $0x18] sm:$0xf]
  %v162 = vld [vmem:[%s2 + $0x1c] sm:$0xf]
  %v163 = vld [vmem:[%s2 + $0x20] sm:$0xf]
  %v164 = vld [vmem:[%s2 + $0x24] sm:$0xf]
  %v165 = vld [vmem:[%s2 + $0x28] sm:$0xf]
  %v166 = vld [vmem:[%s2 + $0x2c] sm:$0xf]
  %v167 = vld [vmem:[%s2 + $0x30] sm:$0xf]
  %v168 = vld [vmem:[%s2 + $0x34] sm:$0xf]
  %v169 = vld [vmem:[%s2 + $0x38] sm:$0xf]
  %v170 = vld [vmem:[%s2 + $0x3c] sm:$0xf]
  %v171 = vpack.c.bf16 %v145, %v142
  %v172 = vpack.c.bf16 %v150, %v150
  %s173 = scalar_lea.vmem %s1, 12
  %v174 = vld [vmem:[%s173] sm:$0xf]
  %v175 = vld [vmem:[%s173 + $0x4] sm:$0xf]
  %v176 = vld [vmem:[%s173 + $0x8] sm:$0xf]
  %v180 = vunpack.c.l.b16 %v174
  %v181 = vunpack.c.l.b16 %v175
  %v182 = vunpack.c.l.b16 %v176
  %v183 = vpack.c.b16 %v181, %v180
  %v184 = vpack.c.b16 %v182, %v182
  %v186 = vsel %vm96, %v183, 0
  %v189 = vsel %vm96, %v184, 0
  %191 = vmatprep.subr.bf16.mxu0 0
  %192 = vmatpush1.bf16.msra.mxu0 0
  %193 = vmatprep.subr.bf16.mxu0 0
  %194 = vmatpush1.bf16.msra.mxu0 0
  %195 = vmatprep.subr.bf16.mxu0 0
  %196 = vmatpush1.bf16.msra.mxu0 0
  %197 = vmatprep.subr.bf16.mxu0 0
  %198 = vmatpush1.bf16.msra.mxu0 0
  %199 = vmatprep.subr.bf16.mxu0 0
  %200 = vmatpush1.bf16.msra.mxu0 %v105
  %201 = vmatprep.subr.bf16.mxu0 0
  %202 = vmatpush1.bf16.msra.mxu0 %v86
  %203 = vmatprep.subr.bf16.mxu0 0
  %204 = vmatpush1.bf16.msra.mxu0 %v85
  %205 = vmatprep.subr.bf16.mxu0 0
  %206 = vmatpush1.bf16.msra.mxu0 %v84
  %207 = vmatprep.subr.bf16.mxu0 0
  %208 = vmatpush2.bf16.msra.mxu0 0
  %209 = vmatprep.subr.bf16.mxu0 0
  %210 = vmatpush2.bf16.msra.mxu0 0
  %211 = vmatprep.subr.bf16.mxu0 0
  %212 = vmatpush2.bf16.msra.mxu0 0
  %213 = vmatprep.subr.bf16.mxu0 0
  %214 = vmatpush2.bf16.msra.mxu0 0
  %215 = vmatprep.subr.bf16.mxu0 0
  %216 = vmatpush2.bf16.msra.mxu0 0
  %217 = vmatprep.subr.bf16.mxu0 0
  %218 = vmatpush2.bf16.msra.mxu0 0
  %219 = vmatprep.subr.bf16.mxu0 0
  %220 = vmatpush2.bf16.msra.mxu0 0
  %221 = vmatprep.subr.bf16.mxu0 0
  %222 = vmatpush2.bf16.msra.mxu0 0
  %223 = vmatprep.mubr.bf16.mxu0 0
  %224 = vmatmul.mubr.bf16.gmra.mxu0 %v186
  %v225 = vpop.f32.mrf.mxu0
  %v226 = vadd.f32 0.0, %v225
  %v227 = vpop.f32.mrf.mxu0
  %v228 = vpop.f32.mrf.mxu0
  %v229 = vadd.f32 0.0, %v228
  %v230 = vpop.f32.mrf.mxu0
  %231 = vmatprep.mubr.bf16.mxu0 0
  %232 = vmatmul.mubr.bf16.gmra.mxu0 %v189
  %v233 = vpop.f32.mrf.mxu0
  %v234 = vadd.f32 0.0, %v233
  %v235 = vpop.f32.mrf.mxu0
  %v236 = vpop.f32.mrf.mxu0
  %v237 = vpop.f32.mrf.mxu0
  %238 = vdwg.mxu0
  %s239 = scalar_lea.vmem %s2, 64
  %v240 = vld [vmem:[%s239] sm:$0xf]
  %v241 = vld [vmem:[%s239 + $0x4] sm:$0xf]
  %v242 = vld [vmem:[%s239 + $0x8] sm:$0xf]
  %v243 = vld [vmem:[%s239 + $0xc] sm:$0xf]
  %v244 = vld [vmem:[%s239 + $0x10] sm:$0xf]
  %v245 = vld [vmem:[%s239 + $0x14] sm:$0xf]
  %v246 = vld [vmem:[%s239 + $0x18] sm:$0xf]
  %v247 = vld [vmem:[%s239 + $0x1c] sm:$0xf]
  %v248 = vld [vmem:[%s239 + $0x20] sm:$0xf]
  %v249 = vld [vmem:[%s239 + $0x24] sm:$0xf]
  %v250 = vld [vmem:[%s239 + $0x28] sm:$0xf]
  %v251 = vld [vmem:[%s239 + $0x2c] sm:$0xf]
  %v252 = vld [vmem:[%s239 + $0x30] sm:$0xf]
  %v253 = vld [vmem:[%s239 + $0x34] sm:$0xf]
  %v254 = vld [vmem:[%s239 + $0x38] sm:$0xf]
  %v255 = vld [vmem:[%s239 + $0x3c] sm:$0xf]
  %v256 = vpack.c.bf16 %v229, %v226
  %v257 = vpack.c.bf16 %v234, %v234
  %v274 = vunpack.c.l.b16 %v240
  %v275 = vunpack.c.l.b16 %v241
  %v276 = vunpack.c.l.b16 %v242
  %v277 = vunpack.c.l.b16 %v243
  %v278 = vunpack.c.l.b16 %v244
  %v279 = vunpack.c.l.b16 %v245
  %v280 = vunpack.c.l.b16 %v246
  %v281 = vunpack.c.l.b16 %v247
  %v282 = vunpack.c.l.b16 %v248
  %v283 = vunpack.c.l.b16 %v249
  %v284 = vunpack.c.l.b16 %v250
  %v285 = vunpack.c.l.b16 %v251
  %v286 = vunpack.c.l.b16 %v252
  %v287 = vunpack.c.l.b16 %v253
  %v288 = vunpack.c.l.b16 %v254
  %v289 = vunpack.c.l.b16 %v255
  %v290 = vpack.c.b16 %v275, %v274
  %v291 = vpack.c.b16 %v277, %v276
  %v292 = vpack.c.b16 %v279, %v278
  %v293 = vpack.c.b16 %v281, %v280
  %v294 = vpack.c.b16 %v283, %v282
  %v295 = vpack.c.b16 %v285, %v284
  %v296 = vpack.c.b16 %v287, %v286
  %v297 = vpack.c.b16 %v289, %v288
  %306 = vmatprep.subr.bf16.mxu0 0
  %307 = vmatpush1.bf16.msra.mxu0 %v297
  %308 = vmatprep.subr.bf16.mxu0 0
  %309 = vmatpush1.bf16.msra.mxu0 %v296
  %310 = vmatprep.subr.bf16.mxu0 0
  %311 = vmatpush1.bf16.msra.mxu0 %v295
  %312 = vmatprep.subr.bf16.mxu0 0
  %313 = vmatpush1.bf16.msra.mxu0 %v294
  %314 = vmatprep.subr.bf16.mxu0 0
  %315 = vmatpush1.bf16.msra.mxu0 %v293
  %316 = vmatprep.subr.bf16.mxu0 0
  %317 = vmatpush1.bf16.msra.mxu0 %v292
  %318 = vmatprep.subr.bf16.mxu0 0
  %319 = vmatpush1.bf16.msra.mxu0 %v291
  %320 = vmatprep.subr.bf16.mxu0 0
  %321 = vmatpush1.bf16.msra.mxu0 %v290
  %322 = vmatprep.subr.bf16.mxu0 0
  %323 = vmatpush2.bf16.msra.mxu0 0
  %324 = vmatprep.subr.bf16.mxu0 0
  %325 = vmatpush2.bf16.msra.mxu0 0
  %326 = vmatprep.subr.bf16.mxu0 0
  %327 = vmatpush2.bf16.msra.mxu0 0
  %328 = vmatprep.subr.bf16.mxu0 0
  %329 = vmatpush2.bf16.msra.mxu0 0
  %330 = vmatprep.subr.bf16.mxu0 0
  %331 = vmatpush2.bf16.msra.mxu0 0
  %332 = vmatprep.subr.bf16.mxu0 0
  %333 = vmatpush2.bf16.msra.mxu0 0
  %334 = vmatprep.subr.bf16.mxu0 0
  %335 = vmatpush2.bf16.msra.mxu0 0
  %336 = vmatprep.subr.bf16.mxu0 0
  %337 = vmatpush2.bf16.msra.mxu0 0
  %338 = vmatprep.mubr.bf16.mxu0 0
  %339 = vmatmul.mubr.bf16.gmra.mxu0 %v256
  %v340 = vpop.f32.mrf.mxu0
  %v341 = vadd.f32 0.0, %v340
  %v342 = vpop.f32.mrf.mxu0
  %v343 = vpop.f32.mrf.mxu0
  %v344 = vadd.f32 0.0, %v343
  %v345 = vpop.f32.mrf.mxu0
  %346 = vmatprep.mubr.bf16.mxu0 0
  %347 = vmatmul.mubr.bf16.gmra.mxu0 %v257
  %v348 = vpop.f32.mrf.mxu0
  %v349 = vadd.f32 0.0, %v348
  %v350 = vpop.f32.mrf.mxu0
  %v351 = vpop.f32.mrf.mxu0
  %v352 = vpop.f32.mrf.mxu0
  %353 = vdwg.mxu0
  %v370 = vunpack.c.l.b16 %v155
  %v371 = vunpack.c.l.b16 %v156
  %v372 = vunpack.c.l.b16 %v157
  %v373 = vunpack.c.l.b16 %v158
  %v374 = vunpack.c.l.b16 %v159
  %v375 = vunpack.c.l.b16 %v160
  %v376 = vunpack.c.l.b16 %v161
  %v377 = vunpack.c.l.b16 %v162
  %v378 = vunpack.c.l.b16 %v163
  %v379 = vunpack.c.l.b16 %v164
  %v380 = vunpack.c.l.b16 %v165
  %v381 = vunpack.c.l.b16 %v166
  %v382 = vunpack.c.l.b16 %v167
  %v383 = vunpack.c.l.b16 %v168
  %v384 = vunpack.c.l.b16 %v169
  %v385 = vunpack.c.l.b16 %v170
  %v386 = vpack.c.b16 %v371, %v370
  %v387 = vpack.c.b16 %v373, %v372
  %v388 = vpack.c.b16 %v375, %v374
  %v389 = vpack.c.b16 %v377, %v376
  %v390 = vpack.c.b16 %v379, %v378
  %v391 = vpack.c.b16 %v381, %v380
  %v392 = vpack.c.b16 %v383, %v382
  %v393 = vpack.c.b16 %v385, %v384
  %402 = vmatprep.subr.bf16.mxu0 0
  %403 = vmatpush1.bf16.msra.mxu0 %v393
  %404 = vmatprep.subr.bf16.mxu0 0
  %405 = vmatpush1.bf16.msra.mxu0 %v392
  %406 = vmatprep.subr.bf16.mxu0 0
  %407 = vmatpush1.bf16.msra.mxu0 %v391
  %408 = vmatprep.subr.bf16.mxu0 0
  %409 = vmatpush1.bf16.msra.mxu0 %v390
  %410 = vmatprep.subr.bf16.mxu0 0
  %411 = vmatpush1.bf16.msra.mxu0 %v389
  %412 = vmatprep.subr.bf16.mxu0 0
  %413 = vmatpush1.bf16.msra.mxu0 %v388
  %414 = vmatprep.subr.bf16.mxu0 0
  %415 = vmatpush1.bf16.msra.mxu0 %v387
  %416 = vmatprep.subr.bf16.mxu0 0
  %417 = vmatpush1.bf16.msra.mxu0 %v386
  %418 = vmatprep.subr.bf16.mxu0 0
  %419 = vmatpush2.bf16.msra.mxu0 0
  %420 = vmatprep.subr.bf16.mxu0 0
  %421 = vmatpush2.bf16.msra.mxu0 0
  %422 = vmatprep.subr.bf16.mxu0 0
  %423 = vmatpush2.bf16.msra.mxu0 0
  %424 = vmatprep.subr.bf16.mxu0 0
  %425 = vmatpush2.bf16.msra.mxu0 0
  %426 = vmatprep.subr.bf16.mxu0 0
  %427 = vmatpush2.bf16.msra.mxu0 0
  %428 = vmatprep.subr.bf16.mxu0 0
  %429 = vmatpush2.bf16.msra.mxu0 0
  %430 = vmatprep.subr.bf16.mxu0 0
  %431 = vmatpush2.bf16.msra.mxu0 0
  %432 = vmatprep.subr.bf16.mxu0 0
  %433 = vmatpush2.bf16.msra.mxu0 0
  %434 = vmatprep.mubr.bf16.mxu0 0
  %435 = vmatmul.mubr.bf16.gmra.mxu0 %v171
  %v436 = vpop.f32.mrf.mxu0
  %v437 = vadd.f32 %v341, %v436
  %v438 = vpop.f32.mrf.mxu0
  %v439 = vpop.f32.mrf.mxu0
  %v440 = vadd.f32 %v344, %v439
  %v441 = vpop.f32.mrf.mxu0
  %442 = vmatprep.mubr.bf16.mxu0 0
  %443 = vmatmul.mubr.bf16.gmra.mxu0 %v172
  %v444 = vpop.f32.mrf.mxu0
  %v445 = vadd.f32 %v349, %v444
  %v446 = vpop.f32.mrf.mxu0
  %v447 = vpop.f32.mrf.mxu0
  %v448 = vpop.f32.mrf.mxu0
  %449 = vdwg.mxu0
  %s450 = scalar_lea.vmem %s1, 24
  %v451 = vld [vmem:[%s450] sm:$0xf]
  %v452 = vld [vmem:[%s450 + $0x4] sm:$0xf]
  %v453 = vld [vmem:[%s450 + $0x8] sm:$0xf]
  %v457 = vunpack.c.l.b16 %v451
  %v458 = vunpack.c.l.b16 %v452
  %v459 = vunpack.c.l.b16 %v453
  %v460 = vpack.c.b16 %v458, %v457
  %v461 = vpack.c.b16 %v459, %v459
  %v463 = vsel %vm96, %v460, 0
  %v466 = vsel %vm96, %v461, 0
  %468 = vmatprep.subr.bf16.mxu0 0
  %469 = vmatpush1.bf16.msra.mxu0 0
  %470 = vmatprep.subr.bf16.mxu0 0
  %471 = vmatpush1.bf16.msra.mxu0 0
  %472 = vmatprep.subr.bf16.mxu0 0
  %473 = vmatpush1.bf16.msra.mxu0 0
  %474 = vmatprep.subr.bf16.mxu0 0
  %475 = vmatpush1.bf16.msra.mxu0 0
  %476 = vmatprep.subr.bf16.mxu0 0
  %477 = vmatpush1.bf16.msra.mxu0 %v105
  %478 = vmatprep.subr.bf16.mxu0 0
  %479 = vmatpush1.bf16.msra.mxu0 %v86
  %480 = vmatprep.subr.bf16.mxu0 0
  %481 = vmatpush1.bf16.msra.mxu0 %v85
  %482 = vmatprep.subr.bf16.mxu0 0
  %483 = vmatpush1.bf16.msra.mxu0 %v84
  %484 = vmatprep.subr.bf16.mxu0 0
  %485 = vmatpush2.bf16.msra.mxu0 0
  %486 = vmatprep.subr.bf16.mxu0 0
  %487 = vmatpush2.bf16.msra.mxu0 0
  %488 = vmatprep.subr.bf16.mxu0 0
  %489 = vmatpush2.bf16.msra.mxu0 0
  %490 = vmatprep.subr.bf16.mxu0 0
  %491 = vmatpush2.bf16.msra.mxu0 0
  %492 = vmatprep.subr.bf16.mxu0 0
  %493 = vmatpush2.bf16.msra.mxu0 0
  %494 = vmatprep.subr.bf16.mxu0 0
  %495 = vmatpush2.bf16.msra.mxu0 0
  %496 = vmatprep.subr.bf16.mxu0 0
  %497 = vmatpush2.bf16.msra.mxu0 0
  %498 = vmatprep.subr.bf16.mxu0 0
  %499 = vmatpush2.bf16.msra.mxu0 0
  %500 = vmatprep.mubr.bf16.mxu0 0
  %501 = vmatmul.mubr.bf16.gmra.mxu0 %v463
  %v502 = vpop.f32.mrf.mxu0
  %v503 = vadd.f32 0.0, %v502
  %v504 = vpop.f32.mrf.mxu0
  %v505 = vpop.f32.mrf.mxu0
  %v506 = vadd.f32 0.0, %v505
  %v507 = vpop.f32.mrf.mxu0
  %508 = vmatprep.mubr.bf16.mxu0 0
  %509 = vmatmul.mubr.bf16.gmra.mxu0 %v466
  %v510 = vpop.f32.mrf.mxu0
  %v511 = vadd.f32 0.0, %v510
  %v512 = vpop.f32.mrf.mxu0
  %v513 = vpop.f32.mrf.mxu0
  %v514 = vpop.f32.mrf.mxu0
  %515 = vdwg.mxu0
  %s516 = scalar_lea.vmem %s2, 128
  %v517 = vld [vmem:[%s516] sm:$0xf]
  %v518 = vld [vmem:[%s516 + $0x4] sm:$0xf]
  %v519 = vld [vmem:[%s516 + $0x8] sm:$0xf]
  %v520 = vld [vmem:[%s516 + $0xc] sm:$0xf]
  %v521 = vld [vmem:[%s516 + $0x10] sm:$0xf]
  %v522 = vld [vmem:[%s516 + $0x14] sm:$0xf]
  %v523 = vld [vmem:[%s516 + $0x18] sm:$0xf]
  %v524 = vld [vmem:[%s516 + $0x1c] sm:$0xf]
  %v525 = vld [vmem:[%s516 + $0x20] sm:$0xf]
  %v526 = vld [vmem:[%s516 + $0x24] sm:$0xf]
  %v527 = vld [vmem:[%s516 + $0x28] sm:$0xf]
  %v528 = vld [vmem:[%s516 + $0x2c] sm:$0xf]
  %v529 = vld [vmem:[%s516 + $0x30] sm:$0xf]
  %v530 = vld [vmem:[%s516 + $0x34] sm:$0xf]
  %v531 = vld [vmem:[%s516 + $0x38] sm:$0xf]
  %v532 = vld [vmem:[%s516 + $0x3c] sm:$0xf]
  %v533 = vpack.c.bf16 %v506, %v503
  %v534 = vpack.c.bf16 %v511, %v511
  %v551 = vunpack.c.l.b16 %v517
  %v552 = vunpack.c.l.b16 %v518
  %v553 = vunpack.c.l.b16 %v519
  %v554 = vunpack.c.l.b16 %v520
  %v555 = vunpack.c.l.b16 %v521
  %v556 = vunpack.c.l.b16 %v522
  %v557 = vunpack.c.l.b16 %v523
  %v558 = vunpack.c.l.b16 %v524
  %v559 = vunpack.c.l.b16 %v525
  %v560 = vunpack.c.l.b16 %v526
  %v561 = vunpack.c.l.b16 %v527
  %v562 = vunpack.c.l.b16 %v528
  %v563 = vunpack.c.l.b16 %v529
  %v564 = vunpack.c.l.b16 %v530
  %v565 = vunpack.c.l.b16 %v531
  %v566 = vunpack.c.l.b16 %v532
  %v567 = vpack.c.b16 %v552, %v551
  %v568 = vpack.c.b16 %v554, %v553
  %v569 = vpack.c.b16 %v556, %v555
  %v570 = vpack.c.b16 %v558, %v557
  %v571 = vpack.c.b16 %v560, %v559
  %v572 = vpack.c.b16 %v562, %v561
  %v573 = vpack.c.b16 %v564, %v563
  %v574 = vpack.c.b16 %v566, %v565
  %583 = vmatprep.subr.bf16.mxu0 0
  %584 = vmatpush1.bf16.msra.mxu0 %v574
  %585 = vmatprep.subr.bf16.mxu0 0
  %586 = vmatpush1.bf16.msra.mxu0 %v573
  %587 = vmatprep.subr.bf16.mxu0 0
  %588 = vmatpush1.bf16.msra.mxu0 %v572
  %589 = vmatprep.subr.bf16.mxu0 0
  %590 = vmatpush1.bf16.msra.mxu0 %v571
  %591 = vmatprep.subr.bf16.mxu0 0
  %592 = vmatpush1.bf16.msra.mxu0 %v570
  %593 = vmatprep.subr.bf16.mxu0 0
  %594 = vmatpush1.bf16.msra.mxu0 %v569
  %595 = vmatprep.subr.bf16.mxu0 0
  %596 = vmatpush1.bf16.msra.mxu0 %v568
  %597 = vmatprep.subr.bf16.mxu0 0
  %598 = vmatpush1.bf16.msra.mxu0 %v567
  %599 = vmatprep.subr.bf16.mxu0 0
  %600 = vmatpush2.bf16.msra.mxu0 0
  %601 = vmatprep.subr.bf16.mxu0 0
  %602 = vmatpush2.bf16.msra.mxu0 0
  %603 = vmatprep.subr.bf16.mxu0 0
  %604 = vmatpush2.bf16.msra.mxu0 0
  %605 = vmatprep.subr.bf16.mxu0 0
  %606 = vmatpush2.bf16.msra.mxu0 0
  %607 = vmatprep.subr.bf16.mxu0 0
  %608 = vmatpush2.bf16.msra.mxu0 0
  %609 = vmatprep.subr.bf16.mxu0 0
  %610 = vmatpush2.bf16.msra.mxu0 0
  %611 = vmatprep.subr.bf16.mxu0 0
  %612 = vmatpush2.bf16.msra.mxu0 0
  %613 = vmatprep.subr.bf16.mxu0 0
  %614 = vmatpush2.bf16.msra.mxu0 0
  %615 = vmatprep.mubr.bf16.mxu0 0
  %616 = vmatmul.mubr.bf16.gmra.mxu0 %v533
  %v617 = vpop.f32.mrf.mxu0
  %v618 = vadd.f32 0.0, %v617
  %v619 = vpop.f32.mrf.mxu0
  %v620 = vpop.f32.mrf.mxu0
  %v621 = vadd.f32 0.0, %v620
  %v622 = vpop.f32.mrf.mxu0
  %623 = vmatprep.mubr.bf16.mxu0 0
  %624 = vmatmul.mubr.bf16.gmra.mxu0 %v534
  %v625 = vpop.f32.mrf.mxu0
  %v626 = vadd.f32 0.0, %v625
  %v627 = vpop.f32.mrf.mxu0
  %v628 = vpop.f32.mrf.mxu0
  %v629 = vpop.f32.mrf.mxu0
  %630 = vdwg.mxu0
  %v631 = vadd.f32 %v437, %v618
  %v632 = vadd.f32 %v440, %v621
  %v633 = vadd.f32 %v445, %v626
  %v634 = vld [vmem:[%s3] sm:$0x1]
  %v636 = vlaneseq
  %v637 = vshrl.u32 %v636, 7
  %v638 = vsub.s32 0, %v637
  %v639 = vrot.slane %v634, %v638
  %v641 = vadd.f32 %v631, %v639
  %v642 = vadd.f32 %v632, %v639
  %v643 = vadd.f32 %v633, %v639
  %v644 = vmax.f32 %v641, 0.0
  %v645 = vmax.f32 %v642, 0.0
  %v646 = vmax.f32 %v643, 0.0
  %v647 = vpack.c.bf16 %v645, %v644
  %v648 = vpack.c.bf16 %v646, %v646
  %v650 = vlaneseq
  %v651 = vshrl.u32 %v650, 7
  %v652 = vsub.s32 0, %v651
  %v653 = vrot.slane %v73, %v652
  %v671 = vunpack.c.l.b16 %v57
  %v672 = vunpack.c.l.b16 %v58
  %v673 = vunpack.c.l.b16 %v59
  %v674 = vunpack.c.l.b16 %v60
  %v675 = vunpack.c.l.b16 %v61
  %v676 = vunpack.c.l.b16 %v62
  %v677 = vunpack.c.l.b16 %v63
  %v678 = vunpack.c.l.b16 %v64
  %v679 = vunpack.c.l.b16 %v65
  %v680 = vunpack.c.l.b16 %v66
  %v681 = vunpack.c.l.b16 %v67
  %v682 = vunpack.c.l.b16 %v68
  %v683 = vunpack.c.l.b16 %v69
  %v684 = vunpack.c.l.b16 %v70
  %v685 = vunpack.c.l.b16 %v71
  %v686 = vunpack.c.l.b16 %v72
  %v687 = vpack.c.b16 %v672, %v671
  %v688 = vpack.c.b16 %v674, %v673
  %v689 = vpack.c.b16 %v676, %v675
  %v690 = vpack.c.b16 %v678, %v677
  %v691 = vpack.c.b16 %v680, %v679
  %v692 = vpack.c.b16 %v682, %v681
  %v693 = vpack.c.b16 %v684, %v683
  %v694 = vpack.c.b16 %v686, %v685
  %703 = vmatprep.subr.bf16.mxu0 0
  %704 = vmatpush1.bf16.msra.mxu0 %v694
  %705 = vmatprep.subr.bf16.mxu0 0
  %706 = vmatpush1.bf16.msra.mxu0 %v693
  %707 = vmatprep.subr.bf16.mxu0 0
  %708 = vmatpush1.bf16.msra.mxu0 %v692
  %709 = vmatprep.subr.bf16.mxu0 0
  %710 = vmatpush1.bf16.msra.mxu0 %v691
  %711 = vmatprep.subr.bf16.mxu0 0
  %712 = vmatpush1.bf16.msra.mxu0 %v690
  %713 = vmatprep.subr.bf16.mxu0 0
  %714 = vmatpush1.bf16.msra.mxu0 %v689
  %715 = vmatprep.subr.bf16.mxu0 0
  %716 = vmatpush1.bf16.msra.mxu0 %v688
  %717 = vmatprep.subr.bf16.mxu0 0
  %718 = vmatpush1.bf16.msra.mxu0 %v687
  %719 = vmatprep.subr.bf16.mxu0 0
  %720 = vmatpush2.bf16.msra.mxu0 0
  %721 = vmatprep.subr.bf16.mxu0 0
  %722 = vmatpush2.bf16.msra.mxu0 0
  %723 = vmatprep.subr.bf16.mxu0 0
  %724 = vmatpush2.bf16.msra.mxu0 0
  %725 = vmatprep.subr.bf16.mxu0 0
  %726 = vmatpush2.bf16.msra.mxu0 0
  %727 = vmatprep.subr.bf16.mxu0 0
  %728 = vmatpush2.bf16.msra.mxu0 0
  %729 = vmatprep.subr.bf16.mxu0 0
  %730 = vmatpush2.bf16.msra.mxu0 0
  %731 = vmatprep.subr.bf16.mxu0 0
  %732 = vmatpush2.bf16.msra.mxu0 0
  %733 = vmatprep.subr.bf16.mxu0 0
  %734 = vmatpush2.bf16.msra.mxu0 0
  %735 = vmatprep.mubr.bf16.mxu0 0
  %736 = vmatmul.mubr.bf16.gmra.mxu0 %v647
  %v737 = vpop.f32.mrf.mxu0
  %v738 = vadd.f32 %v653, %v737
  %v739 = vpop.f32.mrf.mxu0
  %v740 = vpop.f32.mrf.mxu0
  %v741 = vadd.f32 %v653, %v740
  %v742 = vpop.f32.mrf.mxu0
  %743 = vmatprep.mubr.bf16.mxu0 0
  %744 = vmatmul.mubr.bf16.gmra.mxu0 %v648
  %v745 = vpop.f32.mrf.mxu0
  %v746 = vadd.f32 %v653, %v745
  %v747 = vpop.f32.mrf.mxu0
  %v748 = vpop.f32.mrf.mxu0
  %v749 = vpop.f32.mrf.mxu0
  %750 = vdwg.mxu0
  %751 = vst [vmem:[%s14] sm:$0xff] %v738
  %752 = vst [vmem:[%s14 + $0x8] sm:$0xff] %v741
  %753 = vst [vmem:[%s14 + $0x10] sm:$0xff] %v746
  %v754 = vld [vmem:[%s4] sm:$0xf]
  %vm755 = vcmask 195584
  %v757 = vsel %vm755, %v754, 0
  %v760 = vsel %vm103, %v648, 0
  %762 = vmatprep.subr.bf16.mxu0 0
  %763 = vmatpush1.bf16.msra.mxu0 0
  %764 = vmatprep.subr.bf16.mxu0 0
  %765 = vmatpush1.bf16.msra.mxu0 0
  %766 = vmatprep.subr.bf16.mxu0 0
  %767 = vmatpush1.bf16.msra.mxu0 0
  %768 = vmatprep.subr.bf16.mxu0 0
  %769 = vmatpush1.bf16.msra.mxu0 0
  %770 = vmatprep.subr.bf16.mxu0 0
  %771 = vmatpush1.bf16.msra.mxu0 0
  %772 = vmatprep.subr.bf16.mxu0 0
  %773 = vmatpush1.bf16.msra.mxu0 0
  %774 = vmatprep.subr.bf16.mxu0 0
  %775 = vmatpush1.bf16.msra.mxu0 %v760
  %776 = vmatprep.subr.bf16.mxu0 0
  %777 = vmatpush1.bf16.msra.mxu0 %v647
  %778 = vmatprep.subr.bf16.mxu0 0
  %779 = vmatpush2.bf16.msra.mxu0 0
  %780 = vmatprep.subr.bf16.mxu0 0
  %781 = vmatpush2.bf16.msra.mxu0 0
  %782 = vmatprep.subr.bf16.mxu0 0
  %783 = vmatpush2.bf16.msra.mxu0 0
  %784 = vmatprep.subr.bf16.mxu0 0
  %785 = vmatpush2.bf16.msra.mxu0 0
  %786 = vmatprep.subr.bf16.mxu0 0
  %787 = vmatpush2.bf16.msra.mxu0 0
  %788 = vmatprep.subr.bf16.mxu0 0
  %789 = vmatpush2.bf16.msra.mxu0 0
  %790 = vmatprep.subr.bf16.mxu0 0
  %791 = vmatpush2.bf16.msra.mxu0 0
  %792 = vmatprep.subr.bf16.mxu0 0
  %793 = vmatpush2.bf16.msra.mxu0 0
  %794 = vmatprep.mubr.bf16.mxu0 0
  %795 = vmatmul.mubr.bf16.gmra.mxu0 %v757
  %v796 = vpop.f32.mrf.mxu0
  %v797 = vadd.f32 0.0, %v796
  %v798 = vpop.f32.mrf.mxu0
  %v799 = vpop.f32.mrf.mxu0
  %v800 = vpop.f32.mrf.mxu0
  %801 = vdwg.mxu0
  %v802 = vld [vmem:[%s5] sm:$0xf]
  %v803 = vld [vmem:[%s5 + $0x4] sm:$0xf]
  %v804 = vld [vmem:[%s5 + $0x8] sm:$0xf]
  %v805 = vld [vmem:[%s5 + $0xc] sm:$0xf]
  %v806 = vld [vmem:[%s5 + $0x10] sm:$0xf]
  %v807 = vld [vmem:[%s5 + $0x14] sm:$0xf]
  %v808 = vld [vmem:[%s5 + $0x18] sm:$0xf]
  %v809 = vld [vmem:[%s5 + $0x1c] sm:$0xf]
  %v810 = vld [vmem:[%s5 + $0x20] sm:$0xf]
  %v811 = vld [vmem:[%s5 + $0x24] sm:$0xf]
  %v812 = vld [vmem:[%s5 + $0x28] sm:$0xf]
  %v813 = vld [vmem:[%s5 + $0x2c] sm:$0xf]
  %v814 = vld [vmem:[%s5 + $0x30] sm:$0xf]
  %v815 = vld [vmem:[%s5 + $0x34] sm:$0xf]
  %v816 = vld [vmem:[%s5 + $0x38] sm:$0xf]
  %v817 = vld [vmem:[%s5 + $0x3c] sm:$0xf]
  %v818 = vpack.c.bf16 %v797, %v797
  %s819 = scalar_lea.vmem %s4, 4
  %v820 = vld [vmem:[%s819] sm:$0xf]
  %v822 = vsel %vm755, %v820, 0
  %824 = vmatprep.subr.bf16.mxu0 0
  %825 = vmatpush1.bf16.msra.mxu0 0
  %826 = vmatprep.subr.bf16.mxu0 0
  %827 = vmatpush1.bf16.msra.mxu0 0
  %828 = vmatprep.subr.bf16.mxu0 0
  %829 = vmatpush1.bf16.msra.mxu0 0
  %830 = vmatprep.subr.bf16.mxu0 0
  %831 = vmatpush1.bf16.msra.mxu0 0
  %832 = vmatprep.subr.bf16.mxu0 0
  %833 = vmatpush1.bf16.msra.mxu0 0
  %834 = vmatprep.subr.bf16.mxu0 0
  %835 = vmatpush1.bf16.msra.mxu0 0
  %836 = vmatprep.subr.bf16.mxu0 0
  %837 = vmatpush1.bf16.msra.mxu0 %v760
  %838 = vmatprep.subr.bf16.mxu0 0
  %839 = vmatpush1.bf16.msra.mxu0 %v647
  %840 = vmatprep.subr.bf16.mxu0 0
  %841 = vmatpush2.bf16.msra.mxu0 0
  %842 = vmatprep.subr.bf16.mxu0 0
  %843 = vmatpush2.bf16.msra.mxu0 0
  %844 = vmatprep.subr.bf16.mxu0 0
  %845 = vmatpush2.bf16.msra.mxu0 0
  %846 = vmatprep.subr.bf16.mxu0 0
  %847 = vmatpush2.bf16.msra.mxu0 0
  %848 = vmatprep.subr.bf16.mxu0 0
  %849 = vmatpush2.bf16.msra.mxu0 0
  %850 = vmatprep.subr.bf16.mxu0 0
  %851 = vmatpush2.bf16.msra.mxu0 0
  %852 = vmatprep.subr.bf16.mxu0 0
  %853 = vmatpush2.bf16.msra.mxu0 0
  %854 = vmatprep.subr.bf16.mxu0 0
  %855 = vmatpush2.bf16.msra.mxu0 0
  %856 = vmatprep.mubr.bf16.mxu0 0
  %857 = vmatmul.mubr.bf16.gmra.mxu0 %v822
  %v858 = vpop.f32.mrf.mxu0
  %v859 = vadd.f32 0.0, %v858
  %v860 = vpop.f32.mrf.mxu0
  %v861 = vpop.f32.mrf.mxu0
  %v862 = vpop.f32.mrf.mxu0
  %863 = vdwg.mxu0
  %s864 = scalar_lea.vmem %s5, 64
  %v865 = vld [vmem:[%s864] sm:$0xf]
  %v866 = vld [vmem:[%s864 + $0x4] sm:$0xf]
  %v867 = vld [vmem:[%s864 + $0x8] sm:$0xf]
  %v868 = vld [vmem:[%s864 + $0xc] sm:$0xf]
  %v869 = vld [vmem:[%s864 + $0x10] sm:$0xf]
  %v870 = vld [vmem:[%s864 + $0x14] sm:$0xf]
  %v871 = vld [vmem:[%s864 + $0x18] sm:$0xf]
  %v872 = vld [vmem:[%s864 + $0x1c] sm:$0xf]
  %v873 = vld [vmem:[%s864 + $0x20] sm:$0xf]
  %v874 = vld [vmem:[%s864 + $0x24] sm:$0xf]
  %v875 = vld [vmem:[%s864 + $0x28] sm:$0xf]
  %v876 = vld [vmem:[%s864 + $0x2c] sm:$0xf]
  %v877 = vld [vmem:[%s864 + $0x30] sm:$0xf]
  %v878 = vld [vmem:[%s864 + $0x34] sm:$0xf]
  %v879 = vld [vmem:[%s864 + $0x38] sm:$0xf]
  %v880 = vld [vmem:[%s864 + $0x3c] sm:$0xf]
  %v881 = vpack.c.bf16 %v859, %v859
  %v898 = vunpack.c.l.b16 %v865
  %v899 = vunpack.c.l.b16 %v866
  %v900 = vunpack.c.l.b16 %v867
  %v901 = vunpack.c.l.b16 %v868
  %v902 = vunpack.c.l.b16 %v869
  %v903 = vunpack.c.l.b16 %v870
  %v904 = vunpack.c.l.b16 %v871
  %v905 = vunpack.c.l.b16 %v872
  %v906 = vunpack.c.l.b16 %v873
  %v907 = vunpack.c.l.b16 %v874
  %v908 = vunpack.c.l.b16 %v875
  %v909 = vunpack.c.l.b16 %v876
  %v910 = vunpack.c.l.b16 %v877
  %v911 = vunpack.c.l.b16 %v878
  %v912 = vunpack.c.l.b16 %v879
  %v913 = vunpack.c.l.b16 %v880
  %v914 = vpack.c.b16 %v899, %v898
  %v915 = vpack.c.b16 %v901, %v900
  %v916 = vpack.c.b16 %v903, %v902
  %v917 = vpack.c.b16 %v905, %v904
  %v918 = vpack.c.b16 %v907, %v906
  %v919 = vpack.c.b16 %v909, %v908
  %v920 = vpack.c.b16 %v911, %v910
  %v921 = vpack.c.b16 %v913, %v912
  %930 = vmatprep.subr.bf16.mxu0 0
  %931 = vmatpush1.bf16.msra.mxu0 %v921
  %932 = vmatprep.subr.bf16.mxu0 0
  %933 = vmatpush1.bf16.msra.mxu0 %v920
  %934 = vmatprep.subr.bf16.mxu0 0
  %935 = vmatpush1.bf16.msra.mxu0 %v919
  %936 = vmatprep.subr.bf16.mxu0 0
  %937 = vmatpush1.bf16.msra.mxu0 %v918
  %938 = vmatprep.subr.bf16.mxu0 0
  %939 = vmatpush1.bf16.msra.mxu0 %v917
  %940 = vmatprep.subr.bf16.mxu0 0
  %941 = vmatpush1.bf16.msra.mxu0 %v916
  %942 = vmatprep.subr.bf16.mxu0 0
  %943 = vmatpush1.bf16.msra.mxu0 %v915
  %944 = vmatprep.subr.bf16.mxu0 0
  %945 = vmatpush1.bf16.msra.mxu0 %v914
  %946 = vmatprep.subr.bf16.mxu0 0
  %947 = vmatpush2.bf16.msra.mxu0 0
  %948 = vmatprep.subr.bf16.mxu0 0
  %949 = vmatpush2.bf16.msra.mxu0 0
  %950 = vmatprep.subr.bf16.mxu0 0
  %951 = vmatpush2.bf16.msra.mxu0 0
  %952 = vmatprep.subr.bf16.mxu0 0
  %953 = vmatpush2.bf16.msra.mxu0 0
  %954 = vmatprep.subr.bf16.mxu0 0
  %955 = vmatpush2.bf16.msra.mxu0 0
  %956 = vmatprep.subr.bf16.mxu0 0
  %957 = vmatpush2.bf16.msra.mxu0 0
  %958 = vmatprep.subr.bf16.mxu0 0
  %959 = vmatpush2.bf16.msra.mxu0 0
  %960 = vmatprep.subr.bf16.mxu0 0
  %961 = vmatpush2.bf16.msra.mxu0 0
  %962 = vmatprep.mubr.bf16.mxu0 0
  %963 = vmatmul.mubr.bf16.gmra.mxu0 %v881
  %v964 = vpop.f32.mrf.mxu0
  %v965 = vadd.f32 0.0, %v964
  %v966 = vpop.f32.mrf.mxu0
  %v967 = vpop.f32.mrf.mxu0
  %v968 = vpop.f32.mrf.mxu0
  %969 = vdwg.mxu0
  %v986 = vunpack.c.l.b16 %v802
  %v987 = vunpack.c.l.b16 %v803
  %v988 = vunpack.c.l.b16 %v804
  %v989 = vunpack.c.l.b16 %v805
  %v990 = vunpack.c.l.b16 %v806
  %v991 = vunpack.c.l.b16 %v807
  %v992 = vunpack.c.l.b16 %v808
  %v993 = vunpack.c.l.b16 %v809
  %v994 = vunpack.c.l.b16 %v810
  %v995 = vunpack.c.l.b16 %v811
  %v996 = vunpack.c.l.b16 %v812
  %v997 = vunpack.c.l.b16 %v813
  %v998 = vunpack.c.l.b16 %v814
  %v999 = vunpack.c.l.b16 %v815
  %v1000 = vunpack.c.l.b16 %v816
  %v1001 = vunpack.c.l.b16 %v817
  %v1002 = vpack.c.b16 %v987, %v986
  %v1003 = vpack.c.b16 %v989, %v988
  %v1004 = vpack.c.b16 %v991, %v990
  %v1005 = vpack.c.b16 %v993, %v992
  %v1006 = vpack.c.b16 %v995, %v994
  %v1007 = vpack.c.b16 %v997, %v996
  %v1008 = vpack.c.b16 %v999, %v998
  %v1009 = vpack.c.b16 %v1001, %v1000
  %1018 = vmatprep.subr.bf16.mxu0 0
  %1019 = vmatpush1.bf16.msra.mxu0 %v1009
  %1020 = vmatprep.subr.bf16.mxu0 0
  %1021 = vmatpush1.bf16.msra.mxu0 %v1008
  %1022 = vmatprep.subr.bf16.mxu0 0
  %1023 = vmatpush1.bf16.msra.mxu0 %v1007
  %1024 = vmatprep.subr.bf16.mxu0 0
  %1025 = vmatpush1.bf16.msra.mxu0 %v1006
  %1026 = vmatprep.subr.bf16.mxu0 0
  %1027 = vmatpush1.bf16.msra.mxu0 %v1005
  %1028 = vmatprep.subr.bf16.mxu0 0
  %1029 = vmatpush1.bf16.msra.mxu0 %v1004
  %1030 = vmatprep.subr.bf16.mxu0 0
  %1031 = vmatpush1.bf16.msra.mxu0 %v1003
  %1032 = vmatprep.subr.bf16.mxu0 0
  %1033 = vmatpush1.bf16.msra.mxu0 %v1002
  %1034 = vmatprep.subr.bf16.mxu0 0
  %1035 = vmatpush2.bf16.msra.mxu0 0
  %1036 = vmatprep.subr.bf16.mxu0 0
  %1037 = vmatpush2.bf16.msra.mxu0 0
  %1038 = vmatprep.subr.bf16.mxu0 0
  %1039 = vmatpush2.bf16.msra.mxu0 0
  %1040 = vmatprep.subr.bf16.mxu0 0
  %1041 = vmatpush2.bf16.msra.mxu0 0
  %1042 = vmatprep.subr.bf16.mxu0 0
  %1043 = vmatpush2.bf16.msra.mxu0 0
  %1044 = vmatprep.subr.bf16.mxu0 0
  %1045 = vmatpush2.bf16.msra.mxu0 0
  %1046 = vmatprep.subr.bf16.mxu0 0
  %1047 = vmatpush2.bf16.msra.mxu0 0
  %1048 = vmatprep.subr.bf16.mxu0 0
  %1049 = vmatpush2.bf16.msra.mxu0 0
  %1050 = vmatprep.mubr.bf16.mxu0 0
  %1051 = vmatmul.mubr.bf16.gmra.mxu0 %v818
  %v1052 = vpop.f32.mrf.mxu0
  %v1053 = vadd.f32 %v965, %v1052
  %v1054 = vpop.f32.mrf.mxu0
  %v1055 = vpop.f32.mrf.mxu0
  %v1056 = vpop.f32.mrf.mxu0
  %1057 = vdwg.mxu0
  %s1058 = scalar_lea.vmem %s4, 8
  %v1059 = vld [vmem:[%s1058] sm:$0xf]
  %v1061 = vsel %vm755, %v1059, 0
  %1063 = vmatprep.subr.bf16.mxu0 0
  %1064 = vmatpush1.bf16.msra.mxu0 0
  %1065 = vmatprep.subr.bf16.mxu0 0
  %1066 = vmatpush1.bf16.msra.mxu0 0
  %1067 = vmatprep.subr.bf16.mxu0 0
  %1068 = vmatpush1.bf16.msra.mxu0 0
  %1069 = vmatprep.subr.bf16.mxu0 0
  %1070 = vmatpush1.bf16.msra.mxu0 0
  %1071 = vmatprep.subr.bf16.mxu0 0
  %1072 = vmatpush1.bf16.msra.mxu0 0
  %1073 = vmatprep.subr.bf16.mxu0 0
  %1074 = vmatpush1.bf16.msra.mxu0 0
  %1075 = vmatprep.subr.bf16.mxu0 0
  %1076 = vmatpush1.bf16.msra.mxu0 %v760
  %1077 = vmatprep.subr.bf16.mxu0 0
  %1078 = vmatpush1.bf16.msra.mxu0 %v647
  %1079 = vmatprep.subr.bf16.mxu0 0
  %1080 = vmatpush2.bf16.msra.mxu0 0
  %1081 = vmatprep.subr.bf16.mxu0 0
  %1082 = vmatpush2.bf16.msra.mxu0 0
  %1083 = vmatprep.subr.bf16.mxu0 0
  %1084 = vmatpush2.bf16.msra.mxu0 0
  %1085 = vmatprep.subr.bf16.mxu0 0
  %1086 = vmatpush2.bf16.msra.mxu0 0
  %1087 = vmatprep.subr.bf16.mxu0 0
  %1088 = vmatpush2.bf16.msra.mxu0 0
  %1089 = vmatprep.subr.bf16.mxu0 0
  %1090 = vmatpush2.bf16.msra.mxu0 0
  %1091 = vmatprep.subr.bf16.mxu0 0
  %1092 = vmatpush2.bf16.msra.mxu0 0
  %1093 = vmatprep.subr.bf16.mxu0 0
  %1094 = vmatpush2.bf16.msra.mxu0 0
  %1095 = vmatprep.mubr.bf16.mxu0 0
  %1096 = vmatmul.mubr.bf16.gmra.mxu0 %v1061
  %v1097 = vpop.f32.mrf.mxu0
  %v1098 = vadd.f32 0.0, %v1097
  %v1099 = vpop.f32.mrf.mxu0
  %v1100 = vpop.f32.mrf.mxu0
  %v1101 = vpop.f32.mrf.mxu0
  %1102 = vdwg.mxu0
  %s1103 = scalar_lea.vmem %s5, 128
  %v1104 = vld [vmem:[%s1103] sm:$0xf]
  %v1105 = vld [vmem:[%s1103 + $0x4] sm:$0xf]
  %v1106 = vld [vmem:[%s1103 + $0x8] sm:$0xf]
  %v1107 = vld [vmem:[%s1103 + $0xc] sm:$0xf]
  %v1108 = vld [vmem:[%s1103 + $0x10] sm:$0xf]
  %v1109 = vld [vmem:[%s1103 + $0x14] sm:$0xf]
  %v1110 = vld [vmem:[%s1103 + $0x18] sm:$0xf]
  %v1111 = vld [vmem:[%s1103 + $0x1c] sm:$0xf]
  %v1112 = vld [vmem:[%s1103 + $0x20] sm:$0xf]
  %v1113 = vld [vmem:[%s1103 + $0x24] sm:$0xf]
  %v1114 = vld [vmem:[%s1103 + $0x28] sm:$0xf]
  %v1115 = vld [vmem:[%s1103 + $0x2c] sm:$0xf]
  %v1116 = vld [vmem:[%s1103 + $0x30] sm:$0xf]
  %v1117 = vld [vmem:[%s1103 + $0x34] sm:$0xf]
  %v1118 = vld [vmem:[%s1103 + $0x38] sm:$0xf]
  %v1119 = vld [vmem:[%s1103 + $0x3c] sm:$0xf]
  %v1120 = vpack.c.bf16 %v1098, %v1098
  %v1137 = vunpack.c.l.b16 %v1104
  %v1138 = vunpack.c.l.b16 %v1105
  %v1139 = vunpack.c.l.b16 %v1106
  %v1140 = vunpack.c.l.b16 %v1107
  %v1141 = vunpack.c.l.b16 %v1108
  %v1142 = vunpack.c.l.b16 %v1109
  %v1143 = vunpack.c.l.b16 %v1110
  %v1144 = vunpack.c.l.b16 %v1111
  %v1145 = vunpack.c.l.b16 %v1112
  %v1146 = vunpack.c.l.b16 %v1113
  %v1147 = vunpack.c.l.b16 %v1114
  %v1148 = vunpack.c.l.b16 %v1115
  %v1149 = vunpack.c.l.b16 %v1116
  %v1150 = vunpack.c.l.b16 %v1117
  %v1151 = vunpack.c.l.b16 %v1118
  %v1152 = vunpack.c.l.b16 %v1119
  %v1153 = vpack.c.b16 %v1138, %v1137
  %v1154 = vpack.c.b16 %v1140, %v1139
  %v1155 = vpack.c.b16 %v1142, %v1141
  %v1156 = vpack.c.b16 %v1144, %v1143
  %v1157 = vpack.c.b16 %v1146, %v1145
  %v1158 = vpack.c.b16 %v1148, %v1147
  %v1159 = vpack.c.b16 %v1150, %v1149
  %v1160 = vpack.c.b16 %v1152, %v1151
  %1169 = vmatprep.subr.bf16.mxu0 0
  %1170 = vmatpush1.bf16.msra.mxu0 %v1160
  %1171 = vmatprep.subr.bf16.mxu0 0
  %1172 = vmatpush1.bf16.msra.mxu0 %v1159
  %1173 = vmatprep.subr.bf16.mxu0 0
  %1174 = vmatpush1.bf16.msra.mxu0 %v1158
  %1175 = vmatprep.subr.bf16.mxu0 0
  %1176 = vmatpush1.bf16.msra.mxu0 %v1157
  %1177 = vmatprep.subr.bf16.mxu0 0
  %1178 = vmatpush1.bf16.msra.mxu0 %v1156
  %1179 = vmatprep.subr.bf16.mxu0 0
  %1180 = vmatpush1.bf16.msra.mxu0 %v1155
  %1181 = vmatprep.subr.bf16.mxu0 0
  %1182 = vmatpush1.bf16.msra.mxu0 %v1154
  %1183 = vmatprep.subr.bf16.mxu0 0
  %1184 = vmatpush1.bf16.msra.mxu0 %v1153
  %1185 = vmatprep.subr.bf16.mxu0 0
  %1186 = vmatpush2.bf16.msra.mxu0 0
  %1187 = vmatprep.subr.bf16.mxu0 0
  %1188 = vmatpush2.bf16.msra.mxu0 0
  %1189 = vmatprep.subr.bf16.mxu0 0
  %1190 = vmatpush2.bf16.msra.mxu0 0
  %1191 = vmatprep.subr.bf16.mxu0 0
  %1192 = vmatpush2.bf16.msra.mxu0 0
  %1193 = vmatprep.subr.bf16.mxu0 0
  %1194 = vmatpush2.bf16.msra.mxu0 0
  %1195 = vmatprep.subr.bf16.mxu0 0
  %1196 = vmatpush2.bf16.msra.mxu0 0
  %1197 = vmatprep.subr.bf16.mxu0 0
  %1198 = vmatpush2.bf16.msra.mxu0 0
  %1199 = vmatprep.subr.bf16.mxu0 0
  %1200 = vmatpush2.bf16.msra.mxu0 0
  %1201 = vmatprep.mubr.bf16.mxu0 0
  %1202 = vmatmul.mubr.bf16.gmra.mxu0 %v1120
  %v1203 = vpop.f32.mrf.mxu0
  %v1204 = vadd.f32 0.0, %v1203
  %v1205 = vpop.f32.mrf.mxu0
  %v1206 = vpop.f32.mrf.mxu0
  %v1207 = vpop.f32.mrf.mxu0
  %1208 = vdwg.mxu0
  %v1209 = vadd.f32 %v1053, %v1204
  %v1210 = vld [vmem:[%s6] sm:$0x1]
  %v1212 = vlaneseq
  %v1213 = vshrl.u32 %v1212, 7
  %v1214 = vsub.s32 0, %v1213
  %v1215 = vrot.slane %v1210, %v1214
  %v1217 = vadd.f32 %v1209, %v1215
  %v1218 = vmax.f32 %v1217, 0.0
  %v1219 = vld [vmem:[%s7] sm:$0xf]
  %v1220 = vld [vmem:[%s7 + $0x4] sm:$0xf]
  %v1221 = vld [vmem:[%s7 + $0x8] sm:$0xf]
  %v1222 = vld [vmem:[%s7 + $0xc] sm:$0xf]
  %v1223 = vld [vmem:[%s7 + $0x10] sm:$0xf]
  %v1224 = vld [vmem:[%s7 + $0x14] sm:$0xf]
  %v1225 = vld [vmem:[%s7 + $0x18] sm:$0xf]
  %v1226 = vld [vmem:[%s7 + $0x1c] sm:$0xf]
  %v1227 = vld [vmem:[%s7 + $0x20] sm:$0xf]
  %v1228 = vld [vmem:[%s7 + $0x24] sm:$0xf]
  %v1229 = vld [vmem:[%s7 + $0x28] sm:$0xf]
  %v1230 = vld [vmem:[%s7 + $0x2c] sm:$0xf]
  %v1231 = vld [vmem:[%s7 + $0x30] sm:$0xf]
  %v1232 = vld [vmem:[%s7 + $0x34] sm:$0xf]
  %v1233 = vld [vmem:[%s7 + $0x38] sm:$0xf]
  %v1234 = vld [vmem:[%s7 + $0x3c] sm:$0xf]
  %v1235 = vpack.c.bf16 %v1218, %v1218
  %v1236 = vld [vmem:[%s8] sm:$0x1]
  %v1238 = vlaneseq
  %v1239 = vshrl.u32 %v1238, 7
  %v1240 = vsub.s32 0, %v1239
  %v1241 = vrot.slane %v1236, %v1240
  %v1259 = vunpack.c.l.b16 %v1219
  %v1260 = vunpack.c.l.b16 %v1220
  %v1261 = vunpack.c.l.b16 %v1221
  %v1262 = vunpack.c.l.b16 %v1222
  %v1263 = vunpack.c.l.b16 %v1223
  %v1264 = vunpack.c.l.b16 %v1224
  %v1265 = vunpack.c.l.b16 %v1225
  %v1266 = vunpack.c.l.b16 %v1226
  %v1267 = vunpack.c.l.b16 %v1227
  %v1268 = vunpack.c.l.b16 %v1228
  %v1269 = vunpack.c.l.b16 %v1229
  %v1270 = vunpack.c.l.b16 %v1230
  %v1271 = vunpack.c.l.b16 %v1231
  %v1272 = vunpack.c.l.b16 %v1232
  %v1273 = vunpack.c.l.b16 %v1233
  %v1274 = vunpack.c.l.b16 %v1234
  %v1275 = vpack.c.b16 %v1260, %v1259
  %v1276 = vpack.c.b16 %v1262, %v1261
  %v1277 = vpack.c.b16 %v1264, %v1263
  %v1278 = vpack.c.b16 %v1266, %v1265
  %v1279 = vpack.c.b16 %v1268, %v1267
  %v1280 = vpack.c.b16 %v1270, %v1269
  %v1281 = vpack.c.b16 %v1272, %v1271
  %v1282 = vpack.c.b16 %v1274, %v1273
  %1291 = vmatprep.subr.bf16.mxu0 0
  %1292 = vmatpush1.bf16.msra.mxu0 %v1282
  %1293 = vmatprep.subr.bf16.mxu0 0
  %1294 = vmatpush1.bf16.msra.mxu0 %v1281
  %1295 = vmatprep.subr.bf16.mxu0 0
  %1296 = vmatpush1.bf16.msra.mxu0 %v1280
  %1297 = vmatprep.subr.bf16.mxu0 0
  %1298 = vmatpush1.bf16.msra.mxu0 %v1279
  %1299 = vmatprep.subr.bf16.mxu0 0
  %1300 = vmatpush1.bf16.msra.mxu0 %v1278
  %1301 = vmatprep.subr.bf16.mxu0 0
  %1302 = vmatpush1.bf16.msra.mxu0 %v1277
  %1303 = vmatprep.subr.bf16.mxu0 0
  %1304 = vmatpush1.bf16.msra.mxu0 %v1276
  %1305 = vmatprep.subr.bf16.mxu0 0
  %1306 = vmatpush1.bf16.msra.mxu0 %v1275
  %1307 = vmatprep.subr.bf16.mxu0 0
  %1308 = vmatpush2.bf16.msra.mxu0 0
  %1309 = vmatprep.subr.bf16.mxu0 0
  %1310 = vmatpush2.bf16.msra.mxu0 0
  %1311 = vmatprep.subr.bf16.mxu0 0
  %1312 = vmatpush2.bf16.msra.mxu0 0
  %1313 = vmatprep.subr.bf16.mxu0 0
  %1314 = vmatpush2.bf16.msra.mxu0 0
  %1315 = vmatprep.subr.bf16.mxu0 0
  %1316 = vmatpush2.bf16.msra.mxu0 0
  %1317 = vmatprep.subr.bf16.mxu0 0
  %1318 = vmatpush2.bf16.msra.mxu0 0
  %1319 = vmatprep.subr.bf16.mxu0 0
  %1320 = vmatpush2.bf16.msra.mxu0 0
  %1321 = vmatprep.subr.bf16.mxu0 0
  %1322 = vmatpush2.bf16.msra.mxu0 0
  %1323 = vmatprep.mubr.bf16.mxu0 0
  %1324 = vmatmul.mubr.bf16.gmra.mxu0 %v1235
  %v1325 = vpop.f32.mrf.mxu0
  %v1326 = vadd.f32 %v1241, %v1325
  %v1327 = vpop.f32.mrf.mxu0
  %v1328 = vpop.f32.mrf.mxu0
  %v1329 = vpop.f32.mrf.mxu0
  %1330 = vdwg.mxu0
  %v1331 = vmax.f32 %v1326, 0.0
  %v1332 = vmul.f32 %v859, %v56
  %v1333 = vadd.f32 %v1331, %v1332
  %v1334 = vmul.f32 %v1218, %v51
  %v1335 = vadd.f32 %v1334, %v1333
  %v1336 = vld [vmem:[%s9] sm:$0xf]
  %v1337 = vld [vmem:[%s9 + $0x4] sm:$0xf]
  %v1338 = vld [vmem:[%s9 + $0x8] sm:$0xf]
  %v1339 = vld [vmem:[%s9 + $0xc] sm:$0xf]
  %v1340 = vld [vmem:[%s9 + $0x10] sm:$0xf]
  %v1341 = vld [vmem:[%s9 + $0x14] sm:$0xf]
  %v1342 = vld [vmem:[%s9 + $0x18] sm:$0xf]
  %v1343 = vld [vmem:[%s9 + $0x1c] sm:$0xf]
  %v1344 = vld [vmem:[%s9 + $0x20] sm:$0xf]
  %v1345 = vld [vmem:[%s9 + $0x24] sm:$0xf]
  %v1346 = vld [vmem:[%s9 + $0x28] sm:$0xf]
  %v1347 = vld [vmem:[%s9 + $0x2c] sm:$0xf]
  %v1348 = vld [vmem:[%s9 + $0x30] sm:$0xf]
  %v1349 = vld [vmem:[%s9 + $0x34] sm:$0xf]
  %v1350 = vld [vmem:[%s9 + $0x38] sm:$0xf]
  %v1351 = vld [vmem:[%s9 + $0x3c] sm:$0xf]
  %v1352 = vpack.c.bf16 %v1335, %v1335
  %v1353 = vld [vmem:[%s10] sm:$0x1]
  %v1355 = vlaneseq
  %v1356 = vshrl.u32 %v1355, 7
  %v1357 = vsub.s32 0, %v1356
  %v1358 = vrot.slane %v1353, %v1357
  %v1376 = vunpack.c.l.b16 %v1336
  %v1377 = vunpack.c.l.b16 %v1337
  %v1378 = vunpack.c.l.b16 %v1338
  %v1379 = vunpack.c.l.b16 %v1339
  %v1380 = vunpack.c.l.b16 %v1340
  %v1381 = vunpack.c.l.b16 %v1341
  %v1382 = vunpack.c.l.b16 %v1342
  %v1383 = vunpack.c.l.b16 %v1343
  %v1384 = vunpack.c.l.b16 %v1344
  %v1385 = vunpack.c.l.b16 %v1345
  %v1386 = vunpack.c.l.b16 %v1346
  %v1387 = vunpack.c.l.b16 %v1347
  %v1388 = vunpack.c.l.b16 %v1348
  %v1389 = vunpack.c.l.b16 %v1349
  %v1390 = vunpack.c.l.b16 %v1350
  %v1391 = vunpack.c.l.b16 %v1351
  %v1392 = vpack.c.b16 %v1377, %v1376
  %v1393 = vpack.c.b16 %v1379, %v1378
  %v1394 = vpack.c.b16 %v1381, %v1380
  %v1395 = vpack.c.b16 %v1383, %v1382
  %v1396 = vpack.c.b16 %v1385, %v1384
  %v1397 = vpack.c.b16 %v1387, %v1386
  %v1398 = vpack.c.b16 %v1389, %v1388
  %v1399 = vpack.c.b16 %v1391, %v1390
  %1408 = vmatprep.subr.bf16.mxu0 0
  %1409 = vmatpush1.bf16.msra.mxu0 %v1399
  %1410 = vmatprep.subr.bf16.mxu0 0
  %1411 = vmatpush1.bf16.msra.mxu0 %v1398
  %1412 = vmatprep.subr.bf16.mxu0 0
  %1413 = vmatpush1.bf16.msra.mxu0 %v1397
  %1414 = vmatprep.subr.bf16.mxu0 0
  %1415 = vmatpush1.bf16.msra.mxu0 %v1396
  %1416 = vmatprep.subr.bf16.mxu0 0
  %1417 = vmatpush1.bf16.msra.mxu0 %v1395
  %1418 = vmatprep.subr.bf16.mxu0 0
  %1419 = vmatpush1.bf16.msra.mxu0 %v1394
  %1420 = vmatprep.subr.bf16.mxu0 0
  %1421 = vmatpush1.bf16.msra.mxu0 %v1393
  %1422 = vmatprep.subr.bf16.mxu0 0
  %1423 = vmatpush1.bf16.msra.mxu0 %v1392
  %1424 = vmatprep.subr.bf16.mxu0 0
  %1425 = vmatpush2.bf16.msra.mxu0 0
  %1426 = vmatprep.subr.bf16.mxu0 0
  %1427 = vmatpush2.bf16.msra.mxu0 0
  %1428 = vmatprep.subr.bf16.mxu0 0
  %1429 = vmatpush2.bf16.msra.mxu0 0
  %1430 = vmatprep.subr.bf16.mxu0 0
  %1431 = vmatpush2.bf16.msra.mxu0 0
  %1432 = vmatprep.subr.bf16.mxu0 0
  %1433 = vmatpush2.bf16.msra.mxu0 0
  %1434 = vmatprep.subr.bf16.mxu0 0
  %1435 = vmatpush2.bf16.msra.mxu0 0
  %1436 = vmatprep.subr.bf16.mxu0 0
  %1437 = vmatpush2.bf16.msra.mxu0 0
  %1438 = vmatprep.subr.bf16.mxu0 0
  %1439 = vmatpush2.bf16.msra.mxu0 0
  %1440 = vmatprep.mubr.bf16.mxu0 0
  %1441 = vmatmul.mubr.bf16.gmra.mxu0 %v1352
  %v1442 = vpop.f32.mrf.mxu0
  %v1443 = vadd.f32 %v1358, %v1442
  %v1444 = vpop.f32.mrf.mxu0
  %v1445 = vpop.f32.mrf.mxu0
  %v1446 = vpop.f32.mrf.mxu0
  %1447 = vdwg.mxu0
  %v1448 = vmax.f32 %v1443, 0.0
  %v1449 = vmul.f32 %v859, %v51
  %v1450 = vadd.f32 %v1448, %v1449
  %v1451 = vadd.f32 %v1450, %v1333
  %v1452 = vpack.c.bf16 %v1451, %v1451
  %1453 = vmatprep.subr.bf16.mxu0 0
  %1454 = vmatpush1.bf16.msra.mxu0 %v694
  %1455 = vmatprep.subr.bf16.mxu0 0
  %1456 = vmatpush1.bf16.msra.mxu0 %v693
  %1457 = vmatprep.subr.bf16.mxu0 0
  %1458 = vmatpush1.bf16.msra.mxu0 %v692
  %1459 = vmatprep.subr.bf16.mxu0 0
  %1460 = vmatpush1.bf16.msra.mxu0 %v691
  %1461 = vmatprep.subr.bf16.mxu0 0
  %1462 = vmatpush1.bf16.msra.mxu0 %v690
  %1463 = vmatprep.subr.bf16.mxu0 0
  %1464 = vmatpush1.bf16.msra.mxu0 %v689
  %1465 = vmatprep.subr.bf16.mxu0 0
  %1466 = vmatpush1.bf16.msra.mxu0 %v688
  %1467 = vmatprep.subr.bf16.mxu0 0
  %1468 = vmatpush1.bf16.msra.mxu0 %v687
  %1469 = vmatprep.subr.bf16.mxu0 0
  %1470 = vmatpush2.bf16.msra.mxu0 0
  %1471 = vmatprep.subr.bf16.mxu0 0
  %1472 = vmatpush2.bf16.msra.mxu0 0
  %1473 = vmatprep.subr.bf16.mxu0 0
  %1474 = vmatpush2.bf16.msra.mxu0 0
  %1475 = vmatprep.subr.bf16.mxu0 0
  %1476 = vmatpush2.bf16.msra.mxu0 0
  %1477 = vmatprep.subr.bf16.mxu0 0
  %1478 = vmatpush2.bf16.msra.mxu0 0
  %1479 = vmatprep.subr.bf16.mxu0 0
  %1480 = vmatpush2.bf16.msra.mxu0 0
  %1481 = vmatprep.subr.bf16.mxu0 0
  %1482 = vmatpush2.bf16.msra.mxu0 0
  %1483 = vmatprep.subr.bf16.mxu0 0
  %1484 = vmatpush2.bf16.msra.mxu0 0
  %1485 = vmatprep.mubr.bf16.mxu0 0
  %1486 = vmatmul.mubr.bf16.gmra.mxu0 %v1452
  %v1487 = vpop.f32.mrf.mxu0
  %v1488 = vadd.f32 %v653, %v1487
  %v1489 = vpop.f32.mrf.mxu0
  %v1490 = vpop.f32.mrf.mxu0
  %v1491 = vpop.f32.mrf.mxu0
  %1492 = vdwg.mxu0
  %1493 = vst [vmem:[%s14 + $0x18] sm:$0xff] %v1488
  %1494 = vst [vmem:[%s13] sm:$0xff] %v1451
  // Predicated region
  $region54: #{forward.1} parent=0 // pred_check
    _
  $region55: #{forward.1} parent=0 // pred_check_branch
    %1496 = sbr.rel (0) target = $region57
  $region56: #{forward.1} parent=0 // pred_region
    _
  $region57: #{forward.1} parent=0 // pred_fallthru
    _
  // Predicated region
  $region58: #{forward.1} parent=0 // pred_check
    _
  $region59: #{forward.1} parent=0 // pred_check_branch
    %1498 = sbr.rel (0) target = $region61
  $region60: #{forward.1} parent=0 // pred_region
    _
  $region61: #{forward.1} parent=0 // pred_fallthru
    _
  // Predicated region
  $region62: #{forward.1} parent=0 // pred_check
    _
  $region63: #{forward.1} parent=0 // pred_check_branch
    %1500 = sbr.rel (0) target = $region65
  $region64: #{forward.1} parent=0 // pred_region
    _
  $region65: #{forward.1} parent=0 // pred_fallthru
    _
  // Predicated region
  $region66: #{forward.1} parent=0 // pred_check
    _
  $region67: #{forward.1} parent=0 // pred_check_branch
    %1502 = sbr.rel (0) target = $region69
  $region68: #{forward.1} parent=0 // pred_region
    _
  $region69: #{forward.1} parent=0 // pred_fallthru
    _

</llo_original>
